<compile_context>
chip_gen: v5e
topology: v5e:2x2
jax: 0.10.0
libtpu: 0.0.40
codegen_flags: <defaults>
</compile_context>

<pallas_src>
import jax
import jax.numpy as jnp
from jax.experimental import pallas as pl
from jax.experimental.pallas import tpu as pltpu

# ----------------------------- config ---------------------------------------
VOCAB = 100
H = 64
HEADS = 4
HEAD_DIM = H // HEADS
FFN = 128
LAYERS = 2
MAX_POS = 16
B = 2
L = 8
NUM_CLASSES = 6
OUT_PAD = 128          # lane-dense padded logit width (sliced back to 6 outside)
LN_EPS = 1e-5


# --------------------------- kernel helpers ---------------------------------
def _ln(x, gamma, beta, eps=LN_EPS):
    mu = jnp.mean(x, axis=-1, keepdims=True)
    var = jnp.mean(jnp.square(x - mu), axis=-1, keepdims=True)
    return (x - mu) * jax.lax.rsqrt(var + eps) * gamma + beta


# --------------------------- fused Pallas kernel ------------------------------
def fused_forward_kernel(
        x_ref, mask_ref, embg_ref, embb_ref,
        wqkv_ref, bqkv_ref, wo_ref, bo_ref, ln1g_ref, ln1b_ref,
        w1_ref, b1_ref, w2_ref, b2_ref, ln2g_ref, ln2b_ref,
        fcw_ref, fcb_ref,
        o_ref):
    # ---- mask-derived constants: computed once (hoisted out of the layer loop) ----
    mask = mask_ref[...]                              # [B, 1, L] (1.0 keep / 0.0 pad)
    neg_bias = (1.0 - mask) * (-1e9)                  # additive attention bias

    # ---- embedding LayerNorm ----
    x = _ln(x_ref[...].astype(jnp.float32), embg_ref[...], embb_ref[...])   # [B, L, H]

    scale = 1.0 / (HEAD_DIM ** 0.5)

    # ---- encoder layers, statically unrolled (LAYERS is small; weights resident) ----
    for l in range(LAYERS):
        x2 = x.reshape(B * L, H).astype(jnp.bfloat16)

        # Fused QKV: one [B*L, H] x [H, 3H] matmul (bf16 operands, f32 accumulation).
        qkv = (jnp.dot(x2, wqkv_ref[l], preferred_element_type=jnp.float32)
               + bqkv_ref[l])                                              # [B*L, 3H]
        q = qkv[:, 0 * H:1 * H].reshape(B, L, H)
        k = qkv[:, 1 * H:2 * H].reshape(B, L, H)
        v = qkv[:, 2 * H:3 * H].reshape(B, L, H)

        # Per-head attention, batched over B inside each einsum (static head unroll).
        # TODO(synk): the 16-lane per-head slices still cost XLU lane shifts; at real
        # scale produce head-major Q/K/V or use a (B,HEADS)-batched dot_general.
        ctx_heads = []
        for hh in range(HEADS):
            sl = slice(hh * HEAD_DIM, (hh + 1) * HEAD_DIM)
            qh = q[:, :, sl].astype(jnp.bfloat16)
            kh = k[:, :, sl].astype(jnp.bfloat16)
            vh = v[:, :, sl].astype(jnp.bfloat16)
            s = jnp.einsum('bqd,bkd->bqk', qh, kh,
                           preferred_element_type=jnp.float32) * scale     # [B, L, L]
            s = s + neg_bias
            s = s - jnp.max(s, axis=-1, keepdims=True)
            p = jnp.exp(s)
            p = p * pl.reciprocal(jnp.sum(p, axis=-1, keepdims=True), approx=True)
            ctx_heads.append(
                jnp.einsum('bqk,bkd->bqd', p.astype(jnp.bfloat16), vh,
                           preferred_element_type=jnp.float32))            # [B, L, hd]

        # Heads already occupy adjacent lane ranges -> cheap concat, single W_O matmul.
        ctx = jnp.concatenate(ctx_heads, axis=-1).reshape(B * L, H)
        attn = (jnp.dot(ctx.astype(jnp.bfloat16), wo_ref[l],
                        preferred_element_type=jnp.float32)
                + bo_ref[l]).reshape(B, L, H)

        h1 = _ln(x + attn, ln1g_ref[l], ln1b_ref[l])                       # f32

        ff = (jnp.dot(h1.reshape(B * L, H).astype(jnp.bfloat16), w1_ref[l],
                      preferred_element_type=jnp.float32) + b1_ref[l])
        # TODO(synk): HF roberta uses exact erf-GELU; tanh-approx GELU used in-kernel.
        ff = jax.nn.gelu(ff)
        ff = (jnp.dot(ff.astype(jnp.bfloat16), w2_ref[l],
                      preferred_element_type=jnp.float32) + b2_ref[l])

        x = _ln(h1 + ff.reshape(B, L, H), ln2g_ref[l], ln2b_ref[l])

    # ---- epilogue: masked mean pool + fc, lane-dense [B, 128] store ----
    feat_sum = jnp.einsum('bql,blh->bqh', mask, x,
                          preferred_element_type=jnp.float32)              # [B, 1, H]
    cnt = jnp.maximum(jnp.sum(mask, axis=-1, keepdims=True), 1e-9)
    feat = (feat_sum / cnt)[:, 0, :]                                       # [B, H]
    logits = (jnp.dot(feat, fcw_ref[...], preferred_element_type=jnp.float32)
              + fcb_ref[...])
    o_ref[...] = logits                                                    # [B, 128]


# --------------------------- pallas_call wrapper -------------------------------
def fused_forward(x_emb, mask_attn, params):
    args = [x_emb, mask_attn, params['emb_ln_g'], params['emb_ln_b'],
            params['wqkv'], params['bqkv'], params['wo'], params['bo'],
            params['ln1_g'], params['ln1_b'],
            params['w1'], params['b1'], params['w2'], params['b2'],
            params['ln2_g'], params['ln2_b'],
            params['fc_w'], params['fc_b']]

    # Single grid step; every operand is a full, VMEM-resident block.
    in_specs = [pl.BlockSpec(a.shape, lambda i, z=(0,) * a.ndim: z) for a in args]

    out_padded = pl.pallas_call(
        fused_forward_kernel,
        out_shape=jax.ShapeDtypeStruct((B, OUT_PAD), jnp.float32),
        grid=(1,),
        in_specs=in_specs,
        out_specs=pl.BlockSpec((B, OUT_PAD), lambda i: (0, 0)),
        compiler_params=pltpu.CompilerParams(
            dimension_semantics=("arbitrary",)),
    )(*args)
    return out_padded[:, :NUM_CLASSES]


@jax.jit
def deberta_forward(input_ids, attention_mask, params):
    Bx, Lx = input_ids.shape
    # Embeddings (gathers) — plain JAX glue outside the kernel.
    x = (params['word_emb'][input_ids]
         + params['pos_emb'][jnp.arange(Lx)][None, :, :]
         + params['type_emb'][0][None, None, :])
    mask_attn = attention_mask.astype(jnp.float32)[:, None, :]   # [B, 1, L]
    return fused_forward(x, mask_attn, params)


# --------------------------- deterministic params ------------------------------
def init_params(key):
    keys = iter(jax.random.split(key, 64))

    def nrm(shape, std=0.02):
        return jax.random.normal(next(keys), shape, jnp.float32) * std

    bf = jnp.bfloat16
    # Fused QKV weight: [LAYERS, H, 3H], columns ordered Q | K | V.
    wq = nrm((LAYERS, H, H))
    wk = nrm((LAYERS, H, H))
    wv = nrm((LAYERS, H, H))
    params = dict(
        word_emb=nrm((VOCAB, H)),
        pos_emb=nrm((MAX_POS, H)),
        type_emb=nrm((1, H)),
        emb_ln_g=jnp.ones((1, H), jnp.float32),
        emb_ln_b=jnp.zeros((1, H), jnp.float32),
        wqkv=jnp.concatenate([wq, wk, wv], axis=-1).astype(bf),   # [LAYERS, H, 3H]
        bqkv=jnp.zeros((LAYERS, 1, 3 * H), jnp.float32),
        wo=nrm((LAYERS, H, H)).astype(bf),
        bo=jnp.zeros((LAYERS, 1, H), jnp.float32),
        ln1_g=jnp.ones((LAYERS, 1, H), jnp.float32),
        ln1_b=jnp.zeros((LAYERS, 1, H), jnp.float32),
        w1=nrm((LAYERS, H, FFN)).astype(bf),
        b1=jnp.zeros((LAYERS, 1, FFN), jnp.float32),
        w2=nrm((LAYERS, FFN, H)).astype(bf),
        b2=jnp.zeros((LAYERS, 1, H), jnp.float32),
        ln2_g=jnp.ones((LAYERS, 1, H), jnp.float32),
        ln2_b=jnp.zeros((LAYERS, 1, H), jnp.float32),
    )
    # fc: xavier_uniform (matches DebertaModel._init_weights), bias zero.  Padded to
    # 128 output lanes for a lane-dense store; sliced back to 6 in the wrapper.
    bound = (6.0 / (H + NUM_CLASSES)) ** 0.5
    fc_w = jax.random.uniform(next(keys), (H, NUM_CLASSES), jnp.float32,
                              minval=-bound, maxval=bound)
    params['fc_w'] = jnp.pad(fc_w, ((0, 0), (0, OUT_PAD - NUM_CLASSES)))
    params['fc_b'] = jnp.zeros((1, OUT_PAD), jnp.float32)
    return params


# ------------------------------------ main -------------------------------------
if __name__ == "__main__":
    key = jax.random.PRNGKey(0)
    params = init_params(key)

    input_ids = jax.random.randint(jax.random.fold_in(key, 123), (B, L), 0, VOCAB)
    attention_mask = jnp.array([[1, 1, 1, 1, 1, 1, 0, 0],
                                [1, 1, 1, 1, 1, 1, 1, 1]], dtype=jnp.int32)

    out = deberta_forward(input_ids, attention_mask, params)
    out = jax.block_until_ready(out)
    assert out.shape == (B, NUM_CLASSES), out.shape
    assert bool(jnp.all(jnp.isfinite(out)))
    print("KERNEL_OK")
</pallas_src>

<mosaic_0001>
module attributes {stable_mosaic.version = 11 : i64} {
  func.func @fused_forward_kernel(%arg0: i32, %arg1: memref<2x8x64xf32, #tpu.memory_space<vmem>>, %arg2: memref<2x1x8xf32, #tpu.memory_space<vmem>>, %arg3: memref<1x64xf32, #tpu.memory_space<vmem>>, %arg4: memref<1x64xf32, #tpu.memory_space<vmem>>, %arg5: memref<2x64x192xbf16, #tpu.memory_space<vmem>>, %arg6: memref<2x1x192xf32, #tpu.memory_space<vmem>>, %arg7: memref<2x64x64xbf16, #tpu.memory_space<vmem>>, %arg8: memref<2x1x64xf32, #tpu.memory_space<vmem>>, %arg9: memref<2x1x64xf32, #tpu.memory_space<vmem>>, %arg10: memref<2x1x64xf32, #tpu.memory_space<vmem>>, %arg11: memref<2x64x128xbf16, #tpu.memory_space<vmem>>, %arg12: memref<2x1x128xf32, #tpu.memory_space<vmem>>, %arg13: memref<2x128x64xbf16, #tpu.memory_space<vmem>>, %arg14: memref<2x1x64xf32, #tpu.memory_space<vmem>>, %arg15: memref<2x1x64xf32, #tpu.memory_space<vmem>>, %arg16: memref<2x1x64xf32, #tpu.memory_space<vmem>>, %arg17: memref<64x128xf32, #tpu.memory_space<vmem>>, %arg18: memref<1x128xf32, #tpu.memory_space<vmem>>, %arg19: memref<2x128xf32, #tpu.memory_space<vmem>>) attributes {dimension_semantics = [#tpu.dimension_semantics<arbitrary>], iteration_bounds = array<i64: 1>, scalar_prefetch = 0 : i64, scratch_operands = 0 : i64, tpu.core_type = #tpu.core_type<tc>, window_params = [{pipeline_mode = #tpu.pipeline_mode<synchronous>, transform_indices = @transform_0, window_bounds = array<i64: 2, 8, 64>}, {pipeline_mode = #tpu.pipeline_mode<synchronous>, transform_indices = @transform_1, window_bounds = array<i64: 2, 1, 8>}, {pipeline_mode = #tpu.pipeline_mode<synchronous>, transform_indices = @transform_2, window_bounds = array<i64: 1, 64>}, {pipeline_mode = #tpu.pipeline_mode<synchronous>, transform_indices = @transform_3, window_bounds = array<i64: 1, 64>}, {pipeline_mode = #tpu.pipeline_mode<synchronous>, transform_indices = @transform_4, window_bounds = array<i64: 2, 64, 192>}, {pipeline_mode = #tpu.pipeline_mode<synchronous>, transform_indices = @transform_5, window_bounds = array<i64: 2, 1, 192>}, {pipeline_mode = #tpu.pipeline_mode<synchronous>, transform_indices = @transform_6, window_bounds = array<i64: 2, 64, 64>}, {pipeline_mode = #tpu.pipeline_mode<synchronous>, transform_indices = @transform_7, window_bounds = array<i64: 2, 1, 64>}, {pipeline_mode = #tpu.pipeline_mode<synchronous>, transform_indices = @transform_8, window_bounds = array<i64: 2, 1, 64>}, {pipeline_mode = #tpu.pipeline_mode<synchronous>, transform_indices = @transform_9, window_bounds = array<i64: 2, 1, 64>}, {pipeline_mode = #tpu.pipeline_mode<synchronous>, transform_indices = @transform_10, window_bounds = array<i64: 2, 64, 128>}, {pipeline_mode = #tpu.pipeline_mode<synchronous>, transform_indices = @transform_11, window_bounds = array<i64: 2, 1, 128>}, {pipeline_mode = #tpu.pipeline_mode<synchronous>, transform_indices = @transform_12, window_bounds = array<i64: 2, 128, 64>}, {pipeline_mode = #tpu.pipeline_mode<synchronous>, transform_indices = @transform_13, window_bounds = array<i64: 2, 1, 64>}, {pipeline_mode = #tpu.pipeline_mode<synchronous>, transform_indices = @transform_14, window_bounds = array<i64: 2, 1, 64>}, {pipeline_mode = #tpu.pipeline_mode<synchronous>, transform_indices = @transform_15, window_bounds = array<i64: 2, 1, 64>}, {pipeline_mode = #tpu.pipeline_mode<synchronous>, transform_indices = @transform_16, window_bounds = array<i64: 64, 128>}, {pipeline_mode = #tpu.pipeline_mode<synchronous>, transform_indices = @transform_17, window_bounds = array<i64: 1, 128>}, {pipeline_mode = #tpu.pipeline_mode<synchronous>, transform_indices = @transform_18, window_bounds = array<i64: 2, 128>}]} {
    %c0 = arith.constant 0 : index
    %c0_0 = arith.constant 0 : index
    %c0_1 = arith.constant 0 : index
    %0 = vector.load %arg2[%c0, %c0_0, %c0_1] : memref<2x1x8xf32, #tpu.memory_space<vmem>>, vector<2x1x8xf32>
    %cst = arith.constant 1.000000e+00 : f32
    %1 = vector.broadcast %cst : f32 to vector<2x1x8xf32>
    %2 = arith.subf %1, %0 : vector<2x1x8xf32>
    %cst_2 = arith.constant -1.000000e+09 : f32
    %3 = vector.broadcast %cst_2 : f32 to vector<2x1x8xf32>
    %4 = arith.mulf %2, %3 : vector<2x1x8xf32>
    %c0_3 = arith.constant 0 : index
    %c0_4 = arith.constant 0 : index
    %c0_5 = arith.constant 0 : index
    %5 = vector.load %arg1[%c0_3, %c0_4, %c0_5] : memref<2x8x64xf32, #tpu.memory_space<vmem>>, vector<2x8x64xf32>
    %c0_6 = arith.constant 0 : index
    %c0_7 = arith.constant 0 : index
    %6 = vector.load %arg3[%c0_6, %c0_7] : memref<1x64xf32, #tpu.memory_space<vmem>>, vector<1x64xf32>
    %c0_8 = arith.constant 0 : index
    %c0_9 = arith.constant 0 : index
    %7 = vector.load %arg4[%c0_8, %c0_9] : memref<1x64xf32, #tpu.memory_space<vmem>>, vector<1x64xf32>
    %cst_10 = arith.constant dense<0.000000e+00> : vector<2x8xf32>
    %8 = vector.multi_reduction <add>, %5, %cst_10 [2] : vector<2x8x64xf32> to vector<2x8xf32>
    %9 = vector.shape_cast %8 : vector<2x8xf32> to vector<2x8x1xf32>
    %cst_11 = arith.constant 6.400000e+01 : f32
    %10 = vector.broadcast %cst_11 : f32 to vector<2x8x1xf32>
    %11 = arith.divf %9, %10 : vector<2x8x1xf32>
    %12 = vector.broadcast %11 : vector<2x8x1xf32> to vector<2x8x64xf32>
    %13 = arith.subf %5, %12 : vector<2x8x64xf32>
    %14 = arith.mulf %13, %13 : vector<2x8x64xf32>
    %cst_12 = arith.constant dense<0.000000e+00> : vector<2x8xf32>
    %15 = vector.multi_reduction <add>, %14, %cst_12 [2] : vector<2x8x64xf32> to vector<2x8xf32>
    %16 = vector.shape_cast %15 : vector<2x8xf32> to vector<2x8x1xf32>
    %cst_13 = arith.constant 6.400000e+01 : f32
    %17 = vector.broadcast %cst_13 : f32 to vector<2x8x1xf32>
    %18 = arith.divf %16, %17 : vector<2x8x1xf32>
    %19 = vector.broadcast %11 : vector<2x8x1xf32> to vector<2x8x64xf32>
    %20 = arith.subf %5, %19 : vector<2x8x64xf32>
    %cst_14 = arith.constant 9.99999974E-6 : f32
    %21 = vector.broadcast %cst_14 : f32 to vector<2x8x1xf32>
    %22 = arith.addf %18, %21 : vector<2x8x1xf32>
    %23 = math.rsqrt %22 : vector<2x8x1xf32>
    %24 = vector.broadcast %23 : vector<2x8x1xf32> to vector<2x8x64xf32>
    %25 = arith.mulf %20, %24 : vector<2x8x64xf32>
    %26 = vector.shape_cast %6 : vector<1x64xf32> to vector<1x1x64xf32>
    %27 = vector.broadcast %26 : vector<1x1x64xf32> to vector<2x8x64xf32>
    %28 = arith.mulf %25, %27 : vector<2x8x64xf32>
    %29 = vector.shape_cast %7 : vector<1x64xf32> to vector<1x1x64xf32>
    %30 = vector.broadcast %29 : vector<1x1x64xf32> to vector<2x8x64xf32>
    %31 = arith.addf %28, %30 : vector<2x8x64xf32>
    %32 = vector.shape_cast %31 : vector<2x8x64xf32> to vector<16x64xf32>
    %33 = arith.truncf %32 : vector<16x64xf32> to vector<16x64xbf16>
    %c0_15 = arith.constant 0 : index
    %c0_16 = arith.constant 0 : index
    %c0_17 = arith.constant 0 : index
    %34 = vector.load %arg5[%c0_15, %c0_16, %c0_17] : memref<2x64x192xbf16, #tpu.memory_space<vmem>>, vector<1x64x192xbf16>
    %35 = vector.shape_cast %34 : vector<1x64x192xbf16> to vector<64x192xbf16>
    %cst_18 = arith.constant dense<0.000000e+00> : vector<16x192xf32>
    %36 = tpu.matmul %33, %35, %cst_18 {dimension_numbers = #tpu.dot_dimension_numbers<[1], [0], [0], [1], [0, 0, 1, 1], [], []>} : vector<16x64xbf16>, vector<64x192xbf16>, vector<16x192xf32> -> vector<16x192xf32>
    %c0_19 = arith.constant 0 : index
    %c0_20 = arith.constant 0 : index
    %c0_21 = arith.constant 0 : index
    %37 = vector.load %arg6[%c0_19, %c0_20, %c0_21] : memref<2x1x192xf32, #tpu.memory_space<vmem>>, vector<1x1x192xf32>
    %38 = vector.shape_cast %37 : vector<1x1x192xf32> to vector<1x192xf32>
    %39 = vector.broadcast %38 : vector<1x192xf32> to vector<16x192xf32>
    %40 = arith.addf %36, %39 : vector<16x192xf32>
    %41 = vector.extract_strided_slice %40 {offsets = [0, 0], sizes = [16, 64], strides = [1, 1]} : vector<16x192xf32> to vector<16x64xf32>
    %42 = vector.shape_cast %41 : vector<16x64xf32> to vector<2x8x64xf32>
    %43 = vector.extract_strided_slice %40 {offsets = [0, 64], sizes = [16, 64], strides = [1, 1]} : vector<16x192xf32> to vector<16x64xf32>
    %44 = vector.shape_cast %43 : vector<16x64xf32> to vector<2x8x64xf32>
    %45 = vector.extract_strided_slice %40 {offsets = [0, 128], sizes = [16, 64], strides = [1, 1]} : vector<16x192xf32> to vector<16x64xf32>
    %46 = vector.shape_cast %45 : vector<16x64xf32> to vector<2x8x64xf32>
    %47 = vector.extract_strided_slice %42 {offsets = [0, 0, 0], sizes = [2, 8, 16], strides = [1, 1, 1]} : vector<2x8x64xf32> to vector<2x8x16xf32>
    %48 = arith.truncf %47 : vector<2x8x16xf32> to vector<2x8x16xbf16>
    %49 = vector.extract_strided_slice %44 {offsets = [0, 0, 0], sizes = [2, 8, 16], strides = [1, 1, 1]} : vector<2x8x64xf32> to vector<2x8x16xf32>
    %50 = arith.truncf %49 : vector<2x8x16xf32> to vector<2x8x16xbf16>
    %51 = vector.extract_strided_slice %46 {offsets = [0, 0, 0], sizes = [2, 8, 16], strides = [1, 1, 1]} : vector<2x8x64xf32> to vector<2x8x16xf32>
    %52 = arith.truncf %51 : vector<2x8x16xf32> to vector<2x8x16xbf16>
    "tpu.trace_start"() <{level = 10 : i32, message = "bqd,bkd->bqk"}> : () -> ()
    %cst_22 = arith.constant dense<0.000000e+00> : vector<2x8x8xf32>
    %53 = tpu.matmul %48, %50, %cst_22 {dimension_numbers = #tpu.dot_dimension_numbers<[2], [2], [1], [1], [0, 0, 0, 1, 1, 1], [0], [0]>} : vector<2x8x16xbf16>, vector<2x8x16xbf16>, vector<2x8x8xf32> -> vector<2x8x8xf32>
    "tpu.trace_stop"() : () -> ()
    %cst_23 = arith.constant 2.500000e-01 : f32
    %54 = vector.broadcast %cst_23 : f32 to vector<2x8x8xf32>
    %55 = arith.mulf %53, %54 : vector<2x8x8xf32>
    %56 = vector.broadcast %4 : vector<2x1x8xf32> to vector<2x8x8xf32>
    %57 = arith.addf %55, %56 : vector<2x8x8xf32>
    %cst_24 = arith.constant dense<0xFF800000> : vector<2x8xf32>
    %58 = vector.multi_reduction <maximumf>, %57, %cst_24 [2] : vector<2x8x8xf32> to vector<2x8xf32>
    %59 = vector.shape_cast %58 : vector<2x8xf32> to vector<2x8x1xf32>
    %60 = vector.broadcast %59 : vector<2x8x1xf32> to vector<2x8x8xf32>
    %61 = arith.subf %57, %60 : vector<2x8x8xf32>
    %62 = math.exp %61 : vector<2x8x8xf32>
    %cst_25 = arith.constant dense<0.000000e+00> : vector<2x8xf32>
    %63 = vector.multi_reduction <add>, %62, %cst_25 [2] : vector<2x8x8xf32> to vector<2x8xf32>
    %64 = vector.shape_cast %63 : vector<2x8xf32> to vector<2x8x1xf32>
    %65 = tpu.reciprocal %64 {approx = true} : vector<2x8x1xf32> -> vector<2x8x1xf32>
    %66 = vector.broadcast %65 : vector<2x8x1xf32> to vector<2x8x8xf32>
    %67 = arith.mulf %62, %66 : vector<2x8x8xf32>
    %68 = arith.truncf %67 : vector<2x8x8xf32> to vector<2x8x8xbf16>
    "tpu.trace_start"() <{level = 10 : i32, message = "bqk,bkd->bqd"}> : () -> ()
    %cst_26 = arith.constant dense<0.000000e+00> : vector<2x8x16xf32>
    %69 = tpu.matmul %68, %52, %cst_26 {dimension_numbers = #tpu.dot_dimension_numbers<[2], [1], [1], [2], [0, 0, 0, 1, 1, 2], [0], [0]>} : vector<2x8x8xbf16>, vector<2x8x16xbf16>, vector<2x8x16xf32> -> vector<2x8x16xf32>
    "tpu.trace_stop"() : () -> ()
    %70 = vector.extract_strided_slice %42 {offsets = [0, 0, 16], sizes = [2, 8, 16], strides = [1, 1, 1]} : vector<2x8x64xf32> to vector<2x8x16xf32>
    %71 = arith.truncf %70 : vector<2x8x16xf32> to vector<2x8x16xbf16>
    %72 = vector.extract_strided_slice %44 {offsets = [0, 0, 16], sizes = [2, 8, 16], strides = [1, 1, 1]} : vector<2x8x64xf32> to vector<2x8x16xf32>
    %73 = arith.truncf %72 : vector<2x8x16xf32> to vector<2x8x16xbf16>
    %74 = vector.extract_strided_slice %46 {offsets = [0, 0, 16], sizes = [2, 8, 16], strides = [1, 1, 1]} : vector<2x8x64xf32> to vector<2x8x16xf32>
    %75 = arith.truncf %74 : vector<2x8x16xf32> to vector<2x8x16xbf16>
    "tpu.trace_start"() <{level = 10 : i32, message = "bqd,bkd->bqk"}> : () -> ()
    %cst_27 = arith.constant dense<0.000000e+00> : vector<2x8x8xf32>
    %76 = tpu.matmul %71, %73, %cst_27 {dimension_numbers = #tpu.dot_dimension_numbers<[2], [2], [1], [1], [0, 0, 0, 1, 1, 1], [0], [0]>} : vector<2x8x16xbf16>, vector<2x8x16xbf16>, vector<2x8x8xf32> -> vector<2x8x8xf32>
    "tpu.trace_stop"() : () -> ()
    %cst_28 = arith.constant 2.500000e-01 : f32
    %77 = vector.broadcast %cst_28 : f32 to vector<2x8x8xf32>
    %78 = arith.mulf %76, %77 : vector<2x8x8xf32>
    %79 = vector.broadcast %4 : vector<2x1x8xf32> to vector<2x8x8xf32>
    %80 = arith.addf %78, %79 : vector<2x8x8xf32>
    %cst_29 = arith.constant dense<0xFF800000> : vector<2x8xf32>
    %81 = vector.multi_reduction <maximumf>, %80, %cst_29 [2] : vector<2x8x8xf32> to vector<2x8xf32>
    %82 = vector.shape_cast %81 : vector<2x8xf32> to vector<2x8x1xf32>
    %83 = vector.broadcast %82 : vector<2x8x1xf32> to vector<2x8x8xf32>
    %84 = arith.subf %80, %83 : vector<2x8x8xf32>
    %85 = math.exp %84 : vector<2x8x8xf32>
    %cst_30 = arith.constant dense<0.000000e+00> : vector<2x8xf32>
    %86 = vector.multi_reduction <add>, %85, %cst_30 [2] : vector<2x8x8xf32> to vector<2x8xf32>
    %87 = vector.shape_cast %86 : vector<2x8xf32> to vector<2x8x1xf32>
    %88 = tpu.reciprocal %87 {approx = true} : vector<2x8x1xf32> -> vector<2x8x1xf32>
    %89 = vector.broadcast %88 : vector<2x8x1xf32> to vector<2x8x8xf32>
    %90 = arith.mulf %85, %89 : vector<2x8x8xf32>
    %91 = arith.truncf %90 : vector<2x8x8xf32> to vector<2x8x8xbf16>
    "tpu.trace_start"() <{level = 10 : i32, message = "bqk,bkd->bqd"}> : () -> ()
    %cst_31 = arith.constant dense<0.000000e+00> : vector<2x8x16xf32>
    %92 = tpu.matmul %91, %75, %cst_31 {dimension_numbers = #tpu.dot_dimension_numbers<[2], [1], [1], [2], [0, 0, 0, 1, 1, 2], [0], [0]>} : vector<2x8x8xbf16>, vector<2x8x16xbf16>, vector<2x8x16xf32> -> vector<2x8x16xf32>
    "tpu.trace_stop"() : () -> ()
    %93 = vector.extract_strided_slice %42 {offsets = [0, 0, 32], sizes = [2, 8, 16], strides = [1, 1, 1]} : vector<2x8x64xf32> to vector<2x8x16xf32>
    %94 = arith.truncf %93 : vector<2x8x16xf32> to vector<2x8x16xbf16>
    %95 = vector.extract_strided_slice %44 {offsets = [0, 0, 32], sizes = [2, 8, 16], strides = [1, 1, 1]} : vector<2x8x64xf32> to vector<2x8x16xf32>
    %96 = arith.truncf %95 : vector<2x8x16xf32> to vector<2x8x16xbf16>
    %97 = vector.extract_strided_slice %46 {offsets = [0, 0, 32], sizes = [2, 8, 16], strides = [1, 1, 1]} : vector<2x8x64xf32> to vector<2x8x16xf32>
    %98 = arith.truncf %97 : vector<2x8x16xf32> to vector<2x8x16xbf16>
    "tpu.trace_start"() <{level = 10 : i32, message = "bqd,bkd->bqk"}> : () -> ()
    %cst_32 = arith.constant dense<0.000000e+00> : vector<2x8x8xf32>
    %99 = tpu.matmul %94, %96, %cst_32 {dimension_numbers = #tpu.dot_dimension_numbers<[2], [2], [1], [1], [0, 0, 0, 1, 1, 1], [0], [0]>} : vector<2x8x16xbf16>, vector<2x8x16xbf16>, vector<2x8x8xf32> -> vector<2x8x8xf32>
    "tpu.trace_stop"() : () -> ()
    %cst_33 = arith.constant 2.500000e-01 : f32
    %100 = vector.broadcast %cst_33 : f32 to vector<2x8x8xf32>
    %101 = arith.mulf %99, %100 : vector<2x8x8xf32>
    %102 = vector.broadcast %4 : vector<2x1x8xf32> to vector<2x8x8xf32>
    %103 = arith.addf %101, %102 : vector<2x8x8xf32>
    %cst_34 = arith.constant dense<0xFF800000> : vector<2x8xf32>
    %104 = vector.multi_reduction <maximumf>, %103, %cst_34 [2] : vector<2x8x8xf32> to vector<2x8xf32>
    %105 = vector.shape_cast %104 : vector<2x8xf32> to vector<2x8x1xf32>
    %106 = vector.broadcast %105 : vector<2x8x1xf32> to vector<2x8x8xf32>
    %107 = arith.subf %103, %106 : vector<2x8x8xf32>
    %108 = math.exp %107 : vector<2x8x8xf32>
    %cst_35 = arith.constant dense<0.000000e+00> : vector<2x8xf32>
    %109 = vector.multi_reduction <add>, %108, %cst_35 [2] : vector<2x8x8xf32> to vector<2x8xf32>
    %110 = vector.shape_cast %109 : vector<2x8xf32> to vector<2x8x1xf32>
    %111 = tpu.reciprocal %110 {approx = true} : vector<2x8x1xf32> -> vector<2x8x1xf32>
    %112 = vector.broadcast %111 : vector<2x8x1xf32> to vector<2x8x8xf32>
    %113 = arith.mulf %108, %112 : vector<2x8x8xf32>
    %114 = arith.truncf %113 : vector<2x8x8xf32> to vector<2x8x8xbf16>
    "tpu.trace_start"() <{level = 10 : i32, message = "bqk,bkd->bqd"}> : () -> ()
    %cst_36 = arith.constant dense<0.000000e+00> : vector<2x8x16xf32>
    %115 = tpu.matmul %114, %98, %cst_36 {dimension_numbers = #tpu.dot_dimension_numbers<[2], [1], [1], [2], [0, 0, 0, 1, 1, 2], [0], [0]>} : vector<2x8x8xbf16>, vector<2x8x16xbf16>, vector<2x8x16xf32> -> vector<2x8x16xf32>
    "tpu.trace_stop"() : () -> ()
    %116 = vector.extract_strided_slice %42 {offsets = [0, 0, 48], sizes = [2, 8, 16], strides = [1, 1, 1]} : vector<2x8x64xf32> to vector<2x8x16xf32>
    %117 = arith.truncf %116 : vector<2x8x16xf32> to vector<2x8x16xbf16>
    %118 = vector.extract_strided_slice %44 {offsets = [0, 0, 48], sizes = [2, 8, 16], strides = [1, 1, 1]} : vector<2x8x64xf32> to vector<2x8x16xf32>
    %119 = arith.truncf %118 : vector<2x8x16xf32> to vector<2x8x16xbf16>
    %120 = vector.extract_strided_slice %46 {offsets = [0, 0, 48], sizes = [2, 8, 16], strides = [1, 1, 1]} : vector<2x8x64xf32> to vector<2x8x16xf32>
    %121 = arith.truncf %120 : vector<2x8x16xf32> to vector<2x8x16xbf16>
    "tpu.trace_start"() <{level = 10 : i32, message = "bqd,bkd->bqk"}> : () -> ()
    %cst_37 = arith.constant dense<0.000000e+00> : vector<2x8x8xf32>
    %122 = tpu.matmul %117, %119, %cst_37 {dimension_numbers = #tpu.dot_dimension_numbers<[2], [2], [1], [1], [0, 0, 0, 1, 1, 1], [0], [0]>} : vector<2x8x16xbf16>, vector<2x8x16xbf16>, vector<2x8x8xf32> -> vector<2x8x8xf32>
    "tpu.trace_stop"() : () -> ()
    %cst_38 = arith.constant 2.500000e-01 : f32
    %123 = vector.broadcast %cst_38 : f32 to vector<2x8x8xf32>
    %124 = arith.mulf %122, %123 : vector<2x8x8xf32>
    %125 = vector.broadcast %4 : vector<2x1x8xf32> to vector<2x8x8xf32>
    %126 = arith.addf %124, %125 : vector<2x8x8xf32>
    %cst_39 = arith.constant dense<0xFF800000> : vector<2x8xf32>
    %127 = vector.multi_reduction <maximumf>, %126, %cst_39 [2] : vector<2x8x8xf32> to vector<2x8xf32>
    %128 = vector.shape_cast %127 : vector<2x8xf32> to vector<2x8x1xf32>
    %129 = vector.broadcast %128 : vector<2x8x1xf32> to vector<2x8x8xf32>
    %130 = arith.subf %126, %129 : vector<2x8x8xf32>
    %131 = math.exp %130 : vector<2x8x8xf32>
    %cst_40 = arith.constant dense<0.000000e+00> : vector<2x8xf32>
    %132 = vector.multi_reduction <add>, %131, %cst_40 [2] : vector<2x8x8xf32> to vector<2x8xf32>
    %133 = vector.shape_cast %132 : vector<2x8xf32> to vector<2x8x1xf32>
    %134 = tpu.reciprocal %133 {approx = true} : vector<2x8x1xf32> -> vector<2x8x1xf32>
    %135 = vector.broadcast %134 : vector<2x8x1xf32> to vector<2x8x8xf32>
    %136 = arith.mulf %131, %135 : vector<2x8x8xf32>
    %137 = arith.truncf %136 : vector<2x8x8xf32> to vector<2x8x8xbf16>
    "tpu.trace_start"() <{level = 10 : i32, message = "bqk,bkd->bqd"}> : () -> ()
    %cst_41 = arith.constant dense<0.000000e+00> : vector<2x8x16xf32>
    %138 = tpu.matmul %137, %121, %cst_41 {dimension_numbers = #tpu.dot_dimension_numbers<[2], [1], [1], [2], [0, 0, 0, 1, 1, 2], [0], [0]>} : vector<2x8x8xbf16>, vector<2x8x16xbf16>, vector<2x8x16xf32> -> vector<2x8x16xf32>
    "tpu.trace_stop"() : () -> ()
    %139 = tpu.concatenate %69, %92, %115, %138 in 2 : vector<2x8x16xf32>, vector<2x8x16xf32>, vector<2x8x16xf32>, vector<2x8x16xf32> -> vector<2x8x64xf32>
    %140 = vector.shape_cast %139 : vector<2x8x64xf32> to vector<16x64xf32>
    %141 = arith.truncf %140 : vector<16x64xf32> to vector<16x64xbf16>
    %c0_42 = arith.constant 0 : index
    %c0_43 = arith.constant 0 : index
    %c0_44 = arith.constant 0 : index
    %142 = vector.load %arg7[%c0_42, %c0_43, %c0_44] : memref<2x64x64xbf16, #tpu.memory_space<vmem>>, vector<1x64x64xbf16>
    %143 = vector.shape_cast %142 : vector<1x64x64xbf16> to vector<64x64xbf16>
    %cst_45 = arith.constant dense<0.000000e+00> : vector<16x64xf32>
    %144 = tpu.matmul %141, %143, %cst_45 {dimension_numbers = #tpu.dot_dimension_numbers<[1], [0], [0], [1], [0, 0, 1, 1], [], []>} : vector<16x64xbf16>, vector<64x64xbf16>, vector<16x64xf32> -> vector<16x64xf32>
    %c0_46 = arith.constant 0 : index
    %c0_47 = arith.constant 0 : index
    %c0_48 = arith.constant 0 : index
    %145 = vector.load %arg8[%c0_46, %c0_47, %c0_48] : memref<2x1x64xf32, #tpu.memory_space<vmem>>, vector<1x1x64xf32>
    %146 = vector.shape_cast %145 : vector<1x1x64xf32> to vector<1x64xf32>
    %147 = vector.broadcast %146 : vector<1x64xf32> to vector<16x64xf32>
    %148 = arith.addf %144, %147 : vector<16x64xf32>
    %149 = vector.shape_cast %148 : vector<16x64xf32> to vector<2x8x64xf32>
    %150 = arith.addf %31, %149 : vector<2x8x64xf32>
    %c0_49 = arith.constant 0 : index
    %c0_50 = arith.constant 0 : index
    %c0_51 = arith.constant 0 : index
    %151 = vector.load %arg9[%c0_49, %c0_50, %c0_51] : memref<2x1x64xf32, #tpu.memory_space<vmem>>, vector<1x1x64xf32>
    %152 = vector.shape_cast %151 : vector<1x1x64xf32> to vector<1x64xf32>
    %c0_52 = arith.constant 0 : index
    %c0_53 = arith.constant 0 : index
    %c0_54 = arith.constant 0 : index
    %153 = vector.load %arg10[%c0_52, %c0_53, %c0_54] : memref<2x1x64xf32, #tpu.memory_space<vmem>>, vector<1x1x64xf32>
    %154 = vector.shape_cast %153 : vector<1x1x64xf32> to vector<1x64xf32>
    %cst_55 = arith.constant dense<0.000000e+00> : vector<2x8xf32>
    %155 = vector.multi_reduction <add>, %150, %cst_55 [2] : vector<2x8x64xf32> to vector<2x8xf32>
    %156 = vector.shape_cast %155 : vector<2x8xf32> to vector<2x8x1xf32>
    %cst_56 = arith.constant 6.400000e+01 : f32
    %157 = vector.broadcast %cst_56 : f32 to vector<2x8x1xf32>
    %158 = arith.divf %156, %157 : vector<2x8x1xf32>
    %159 = vector.broadcast %158 : vector<2x8x1xf32> to vector<2x8x64xf32>
    %160 = arith.subf %150, %159 : vector<2x8x64xf32>
    %161 = arith.mulf %160, %160 : vector<2x8x64xf32>
    %cst_57 = arith.constant dense<0.000000e+00> : vector<2x8xf32>
    %162 = vector.multi_reduction <add>, %161, %cst_57 [2] : vector<2x8x64xf32> to vector<2x8xf32>
    %163 = vector.shape_cast %162 : vector<2x8xf32> to vector<2x8x1xf32>
    %cst_58 = arith.constant 6.400000e+01 : f32
    %164 = vector.broadcast %cst_58 : f32 to vector<2x8x1xf32>
    %165 = arith.divf %163, %164 : vector<2x8x1xf32>
    %166 = vector.broadcast %158 : vector<2x8x1xf32> to vector<2x8x64xf32>
    %167 = arith.subf %150, %166 : vector<2x8x64xf32>
    %cst_59 = arith.constant 9.99999974E-6 : f32
    %168 = vector.broadcast %cst_59 : f32 to vector<2x8x1xf32>
    %169 = arith.addf %165, %168 : vector<2x8x1xf32>
    %170 = math.rsqrt %169 : vector<2x8x1xf32>
    %171 = vector.broadcast %170 : vector<2x8x1xf32> to vector<2x8x64xf32>
    %172 = arith.mulf %167, %171 : vector<2x8x64xf32>
    %173 = vector.shape_cast %152 : vector<1x64xf32> to vector<1x1x64xf32>
    %174 = vector.broadcast %173 : vector<1x1x64xf32> to vector<2x8x64xf32>
    %175 = arith.mulf %172, %174 : vector<2x8x64xf32>
    %176 = vector.shape_cast %154 : vector<1x64xf32> to vector<1x1x64xf32>
    %177 = vector.broadcast %176 : vector<1x1x64xf32> to vector<2x8x64xf32>
    %178 = arith.addf %175, %177 : vector<2x8x64xf32>
    %179 = vector.shape_cast %178 : vector<2x8x64xf32> to vector<16x64xf32>
    %180 = arith.truncf %179 : vector<16x64xf32> to vector<16x64xbf16>
    %c0_60 = arith.constant 0 : index
    %c0_61 = arith.constant 0 : index
    %c0_62 = arith.constant 0 : index
    %181 = vector.load %arg11[%c0_60, %c0_61, %c0_62] : memref<2x64x128xbf16, #tpu.memory_space<vmem>>, vector<1x64x128xbf16>
    %182 = vector.shape_cast %181 : vector<1x64x128xbf16> to vector<64x128xbf16>
    %cst_63 = arith.constant dense<0.000000e+00> : vector<16x128xf32>
    %183 = tpu.matmul %180, %182, %cst_63 {dimension_numbers = #tpu.dot_dimension_numbers<[1], [0], [0], [1], [0, 0, 1, 1], [], []>} : vector<16x64xbf16>, vector<64x128xbf16>, vector<16x128xf32> -> vector<16x128xf32>
    %c0_64 = arith.constant 0 : index
    %c0_65 = arith.constant 0 : index
    %c0_66 = arith.constant 0 : index
    %184 = vector.load %arg12[%c0_64, %c0_65, %c0_66] : memref<2x1x128xf32, #tpu.memory_space<vmem>>, vector<1x1x128xf32>
    %185 = vector.shape_cast %184 : vector<1x1x128xf32> to vector<1x128xf32>
    %186 = vector.broadcast %185 : vector<1x128xf32> to vector<16x128xf32>
    %187 = arith.addf %183, %186 : vector<16x128xf32>
    %188 = arith.mulf %187, %187 : vector<16x128xf32>
    %189 = arith.mulf %187, %188 : vector<16x128xf32>
    %cst_67 = arith.constant 4.471500e-02 : f32
    %190 = vector.broadcast %cst_67 : f32 to vector<16x128xf32>
    %191 = arith.mulf %190, %189 : vector<16x128xf32>
    %192 = arith.addf %187, %191 : vector<16x128xf32>
    %cst_68 = arith.constant 0.797884583 : f32
    %193 = vector.broadcast %cst_68 : f32 to vector<16x128xf32>
    %194 = arith.mulf %193, %192 : vector<16x128xf32>
    %195 = math.tanh %194 : vector<16x128xf32>
    %cst_69 = arith.constant 1.000000e+00 : f32
    %196 = vector.broadcast %cst_69 : f32 to vector<16x128xf32>
    %197 = arith.addf %196, %195 : vector<16x128xf32>
    %cst_70 = arith.constant 5.000000e-01 : f32
    %198 = vector.broadcast %cst_70 : f32 to vector<16x128xf32>
    %199 = arith.mulf %198, %197 : vector<16x128xf32>
    %200 = arith.mulf %187, %199 : vector<16x128xf32>
    %201 = arith.truncf %200 : vector<16x128xf32> to vector<16x128xbf16>
    %c0_71 = arith.constant 0 : index
    %c0_72 = arith.constant 0 : index
    %c0_73 = arith.constant 0 : index
    %202 = vector.load %arg13[%c0_71, %c0_72, %c0_73] : memref<2x128x64xbf16, #tpu.memory_space<vmem>>, vector<1x128x64xbf16>
    %203 = vector.shape_cast %202 : vector<1x128x64xbf16> to vector<128x64xbf16>
    %cst_74 = arith.constant dense<0.000000e+00> : vector<16x64xf32>
    %204 = tpu.matmul %201, %203, %cst_74 {dimension_numbers = #tpu.dot_dimension_numbers<[1], [0], [0], [1], [0, 0, 1, 1], [], []>} : vector<16x128xbf16>, vector<128x64xbf16>, vector<16x64xf32> -> vector<16x64xf32>
    %c0_75 = arith.constant 0 : index
    %c0_76 = arith.constant 0 : index
    %c0_77 = arith.constant 0 : index
    %205 = vector.load %arg14[%c0_75, %c0_76, %c0_77] : memref<2x1x64xf32, #tpu.memory_space<vmem>>, vector<1x1x64xf32>
    %206 = vector.shape_cast %205 : vector<1x1x64xf32> to vector<1x64xf32>
    %207 = vector.broadcast %206 : vector<1x64xf32> to vector<16x64xf32>
    %208 = arith.addf %204, %207 : vector<16x64xf32>
    %209 = vector.shape_cast %208 : vector<16x64xf32> to vector<2x8x64xf32>
    %210 = arith.addf %178, %209 : vector<2x8x64xf32>
    %c0_78 = arith.constant 0 : index
    %c0_79 = arith.constant 0 : index
    %c0_80 = arith.constant 0 : index
    %211 = vector.load %arg15[%c0_78, %c0_79, %c0_80] : memref<2x1x64xf32, #tpu.memory_space<vmem>>, vector<1x1x64xf32>
    %212 = vector.shape_cast %211 : vector<1x1x64xf32> to vector<1x64xf32>
    %c0_81 = arith.constant 0 : index
    %c0_82 = arith.constant 0 : index
    %c0_83 = arith.constant 0 : index
    %213 = vector.load %arg16[%c0_81, %c0_82, %c0_83] : memref<2x1x64xf32, #tpu.memory_space<vmem>>, vector<1x1x64xf32>
    %214 = vector.shape_cast %213 : vector<1x1x64xf32> to vector<1x64xf32>
    %cst_84 = arith.constant dense<0.000000e+00> : vector<2x8xf32>
    %215 = vector.multi_reduction <add>, %210, %cst_84 [2] : vector<2x8x64xf32> to vector<2x8xf32>
    %216 = vector.shape_cast %215 : vector<2x8xf32> to vector<2x8x1xf32>
    %cst_85 = arith.constant 6.400000e+01 : f32
    %217 = vector.broadcast %cst_85 : f32 to vector<2x8x1xf32>
    %218 = arith.divf %216, %217 : vector<2x8x1xf32>
    %219 = vector.broadcast %218 : vector<2x8x1xf32> to vector<2x8x64xf32>
    %220 = arith.subf %210, %219 : vector<2x8x64xf32>
    %221 = arith.mulf %220, %220 : vector<2x8x64xf32>
    %cst_86 = arith.constant dense<0.000000e+00> : vector<2x8xf32>
    %222 = vector.multi_reduction <add>, %221, %cst_86 [2] : vector<2x8x64xf32> to vector<2x8xf32>
    %223 = vector.shape_cast %222 : vector<2x8xf32> to vector<2x8x1xf32>
    %cst_87 = arith.constant 6.400000e+01 : f32
    %224 = vector.broadcast %cst_87 : f32 to vector<2x8x1xf32>
    %225 = arith.divf %223, %224 : vector<2x8x1xf32>
    %226 = vector.broadcast %218 : vector<2x8x1xf32> to vector<2x8x64xf32>
    %227 = arith.subf %210, %226 : vector<2x8x64xf32>
    %cst_88 = arith.constant 9.99999974E-6 : f32
    %228 = vector.broadcast %cst_88 : f32 to vector<2x8x1xf32>
    %229 = arith.addf %225, %228 : vector<2x8x1xf32>
    %230 = math.rsqrt %229 : vector<2x8x1xf32>
    %231 = vector.broadcast %230 : vector<2x8x1xf32> to vector<2x8x64xf32>
    %232 = arith.mulf %227, %231 : vector<2x8x64xf32>
    %233 = vector.shape_cast %212 : vector<1x64xf32> to vector<1x1x64xf32>
    %234 = vector.broadcast %233 : vector<1x1x64xf32> to vector<2x8x64xf32>
    %235 = arith.mulf %232, %234 : vector<2x8x64xf32>
    %236 = vector.shape_cast %214 : vector<1x64xf32> to vector<1x1x64xf32>
    %237 = vector.broadcast %236 : vector<1x1x64xf32> to vector<2x8x64xf32>
    %238 = arith.addf %235, %237 : vector<2x8x64xf32>
    %239 = vector.shape_cast %238 : vector<2x8x64xf32> to vector<16x64xf32>
    %240 = arith.truncf %239 : vector<16x64xf32> to vector<16x64xbf16>
    %c1 = arith.constant 1 : index
    %c0_89 = arith.constant 0 : index
    %c0_90 = arith.constant 0 : index
    %241 = vector.load %arg5[%c1, %c0_89, %c0_90] : memref<2x64x192xbf16, #tpu.memory_space<vmem>>, vector<1x64x192xbf16>
    %242 = vector.shape_cast %241 : vector<1x64x192xbf16> to vector<64x192xbf16>
    %cst_91 = arith.constant dense<0.000000e+00> : vector<16x192xf32>
    %243 = tpu.matmul %240, %242, %cst_91 {dimension_numbers = #tpu.dot_dimension_numbers<[1], [0], [0], [1], [0, 0, 1, 1], [], []>} : vector<16x64xbf16>, vector<64x192xbf16>, vector<16x192xf32> -> vector<16x192xf32>
    %c1_92 = arith.constant 1 : index
    %c0_93 = arith.constant 0 : index
    %c0_94 = arith.constant 0 : index
    %244 = vector.load %arg6[%c1_92, %c0_93, %c0_94] : memref<2x1x192xf32, #tpu.memory_space<vmem>>, vector<1x1x192xf32>
    %245 = vector.shape_cast %244 : vector<1x1x192xf32> to vector<1x192xf32>
    %246 = vector.broadcast %245 : vector<1x192xf32> to vector<16x192xf32>
    %247 = arith.addf %243, %246 : vector<16x192xf32>
    %248 = vector.extract_strided_slice %247 {offsets = [0, 0], sizes = [16, 64], strides = [1, 1]} : vector<16x192xf32> to vector<16x64xf32>
    %249 = vector.shape_cast %248 : vector<16x64xf32> to vector<2x8x64xf32>
    %250 = vector.extract_strided_slice %247 {offsets = [0, 64], sizes = [16, 64], strides = [1, 1]} : vector<16x192xf32> to vector<16x64xf32>
    %251 = vector.shape_cast %250 : vector<16x64xf32> to vector<2x8x64xf32>
    %252 = vector.extract_strided_slice %247 {offsets = [0, 128], sizes = [16, 64], strides = [1, 1]} : vector<16x192xf32> to vector<16x64xf32>
    %253 = vector.shape_cast %252 : vector<16x64xf32> to vector<2x8x64xf32>
    %254 = vector.extract_strided_slice %249 {offsets = [0, 0, 0], sizes = [2, 8, 16], strides = [1, 1, 1]} : vector<2x8x64xf32> to vector<2x8x16xf32>
    %255 = arith.truncf %254 : vector<2x8x16xf32> to vector<2x8x16xbf16>
    %256 = vector.extract_strided_slice %251 {offsets = [0, 0, 0], sizes = [2, 8, 16], strides = [1, 1, 1]} : vector<2x8x64xf32> to vector<2x8x16xf32>
    %257 = arith.truncf %256 : vector<2x8x16xf32> to vector<2x8x16xbf16>
    %258 = vector.extract_strided_slice %253 {offsets = [0, 0, 0], sizes = [2, 8, 16], strides = [1, 1, 1]} : vector<2x8x64xf32> to vector<2x8x16xf32>
    %259 = arith.truncf %258 : vector<2x8x16xf32> to vector<2x8x16xbf16>
    "tpu.trace_start"() <{level = 10 : i32, message = "bqd,bkd->bqk"}> : () -> ()
    %cst_95 = arith.constant dense<0.000000e+00> : vector<2x8x8xf32>
    %260 = tpu.matmul %255, %257, %cst_95 {dimension_numbers = #tpu.dot_dimension_numbers<[2], [2], [1], [1], [0, 0, 0, 1, 1, 1], [0], [0]>} : vector<2x8x16xbf16>, vector<2x8x16xbf16>, vector<2x8x8xf32> -> vector<2x8x8xf32>
    "tpu.trace_stop"() : () -> ()
    %cst_96 = arith.constant 2.500000e-01 : f32
    %261 = vector.broadcast %cst_96 : f32 to vector<2x8x8xf32>
    %262 = arith.mulf %260, %261 : vector<2x8x8xf32>
    %263 = vector.broadcast %4 : vector<2x1x8xf32> to vector<2x8x8xf32>
    %264 = arith.addf %262, %263 : vector<2x8x8xf32>
    %cst_97 = arith.constant dense<0xFF800000> : vector<2x8xf32>
    %265 = vector.multi_reduction <maximumf>, %264, %cst_97 [2] : vector<2x8x8xf32> to vector<2x8xf32>
    %266 = vector.shape_cast %265 : vector<2x8xf32> to vector<2x8x1xf32>
    %267 = vector.broadcast %266 : vector<2x8x1xf32> to vector<2x8x8xf32>
    %268 = arith.subf %264, %267 : vector<2x8x8xf32>
    %269 = math.exp %268 : vector<2x8x8xf32>
    %cst_98 = arith.constant dense<0.000000e+00> : vector<2x8xf32>
    %270 = vector.multi_reduction <add>, %269, %cst_98 [2] : vector<2x8x8xf32> to vector<2x8xf32>
    %271 = vector.shape_cast %270 : vector<2x8xf32> to vector<2x8x1xf32>
    %272 = tpu.reciprocal %271 {approx = true} : vector<2x8x1xf32> -> vector<2x8x1xf32>
    %273 = vector.broadcast %272 : vector<2x8x1xf32> to vector<2x8x8xf32>
    %274 = arith.mulf %269, %273 : vector<2x8x8xf32>
    %275 = arith.truncf %274 : vector<2x8x8xf32> to vector<2x8x8xbf16>
    "tpu.trace_start"() <{level = 10 : i32, message = "bqk,bkd->bqd"}> : () -> ()
    %cst_99 = arith.constant dense<0.000000e+00> : vector<2x8x16xf32>
    %276 = tpu.matmul %275, %259, %cst_99 {dimension_numbers = #tpu.dot_dimension_numbers<[2], [1], [1], [2], [0, 0, 0, 1, 1, 2], [0], [0]>} : vector<2x8x8xbf16>, vector<2x8x16xbf16>, vector<2x8x16xf32> -> vector<2x8x16xf32>
    "tpu.trace_stop"() : () -> ()
    %277 = vector.extract_strided_slice %249 {offsets = [0, 0, 16], sizes = [2, 8, 16], strides = [1, 1, 1]} : vector<2x8x64xf32> to vector<2x8x16xf32>
    %278 = arith.truncf %277 : vector<2x8x16xf32> to vector<2x8x16xbf16>
    %279 = vector.extract_strided_slice %251 {offsets = [0, 0, 16], sizes = [2, 8, 16], strides = [1, 1, 1]} : vector<2x8x64xf32> to vector<2x8x16xf32>
    %280 = arith.truncf %279 : vector<2x8x16xf32> to vector<2x8x16xbf16>
    %281 = vector.extract_strided_slice %253 {offsets = [0, 0, 16], sizes = [2, 8, 16], strides = [1, 1, 1]} : vector<2x8x64xf32> to vector<2x8x16xf32>
    %282 = arith.truncf %281 : vector<2x8x16xf32> to vector<2x8x16xbf16>
    "tpu.trace_start"() <{level = 10 : i32, message = "bqd,bkd->bqk"}> : () -> ()
    %cst_100 = arith.constant dense<0.000000e+00> : vector<2x8x8xf32>
    %283 = tpu.matmul %278, %280, %cst_100 {dimension_numbers = #tpu.dot_dimension_numbers<[2], [2], [1], [1], [0, 0, 0, 1, 1, 1], [0], [0]>} : vector<2x8x16xbf16>, vector<2x8x16xbf16>, vector<2x8x8xf32> -> vector<2x8x8xf32>
    "tpu.trace_stop"() : () -> ()
    %cst_101 = arith.constant 2.500000e-01 : f32
    %284 = vector.broadcast %cst_101 : f32 to vector<2x8x8xf32>
    %285 = arith.mulf %283, %284 : vector<2x8x8xf32>
    %286 = vector.broadcast %4 : vector<2x1x8xf32> to vector<2x8x8xf32>
    %287 = arith.addf %285, %286 : vector<2x8x8xf32>
    %cst_102 = arith.constant dense<0xFF800000> : vector<2x8xf32>
    %288 = vector.multi_reduction <maximumf>, %287, %cst_102 [2] : vector<2x8x8xf32> to vector<2x8xf32>
    %289 = vector.shape_cast %288 : vector<2x8xf32> to vector<2x8x1xf32>
    %290 = vector.broadcast %289 : vector<2x8x1xf32> to vector<2x8x8xf32>
    %291 = arith.subf %287, %290 : vector<2x8x8xf32>
    %292 = math.exp %291 : vector<2x8x8xf32>
    %cst_103 = arith.constant dense<0.000000e+00> : vector<2x8xf32>
    %293 = vector.multi_reduction <add>, %292, %cst_103 [2] : vector<2x8x8xf32> to vector<2x8xf32>
    %294 = vector.shape_cast %293 : vector<2x8xf32> to vector<2x8x1xf32>
    %295 = tpu.reciprocal %294 {approx = true} : vector<2x8x1xf32> -> vector<2x8x1xf32>
    %296 = vector.broadcast %295 : vector<2x8x1xf32> to vector<2x8x8xf32>
    %297 = arith.mulf %292, %296 : vector<2x8x8xf32>
    %298 = arith.truncf %297 : vector<2x8x8xf32> to vector<2x8x8xbf16>
    "tpu.trace_start"() <{level = 10 : i32, message = "bqk,bkd->bqd"}> : () -> ()
    %cst_104 = arith.constant dense<0.000000e+00> : vector<2x8x16xf32>
    %299 = tpu.matmul %298, %282, %cst_104 {dimension_numbers = #tpu.dot_dimension_numbers<[2], [1], [1], [2], [0, 0, 0, 1, 1, 2], [0], [0]>} : vector<2x8x8xbf16>, vector<2x8x16xbf16>, vector<2x8x16xf32> -> vector<2x8x16xf32>
    "tpu.trace_stop"() : () -> ()
    %300 = vector.extract_strided_slice %249 {offsets = [0, 0, 32], sizes = [2, 8, 16], strides = [1, 1, 1]} : vector<2x8x64xf32> to vector<2x8x16xf32>
    %301 = arith.truncf %300 : vector<2x8x16xf32> to vector<2x8x16xbf16>
    %302 = vector.extract_strided_slice %251 {offsets = [0, 0, 32], sizes = [2, 8, 16], strides = [1, 1, 1]} : vector<2x8x64xf32> to vector<2x8x16xf32>
    %303 = arith.truncf %302 : vector<2x8x16xf32> to vector<2x8x16xbf16>
    %304 = vector.extract_strided_slice %253 {offsets = [0, 0, 32], sizes = [2, 8, 16], strides = [1, 1, 1]} : vector<2x8x64xf32> to vector<2x8x16xf32>
    %305 = arith.truncf %304 : vector<2x8x16xf32> to vector<2x8x16xbf16>
    "tpu.trace_start"() <{level = 10 : i32, message = "bqd,bkd->bqk"}> : () -> ()
    %cst_105 = arith.constant dense<0.000000e+00> : vector<2x8x8xf32>
    %306 = tpu.matmul %301, %303, %cst_105 {dimension_numbers = #tpu.dot_dimension_numbers<[2], [2], [1], [1], [0, 0, 0, 1, 1, 1], [0], [0]>} : vector<2x8x16xbf16>, vector<2x8x16xbf16>, vector<2x8x8xf32> -> vector<2x8x8xf32>
    "tpu.trace_stop"() : () -> ()
    %cst_106 = arith.constant 2.500000e-01 : f32
    %307 = vector.broadcast %cst_106 : f32 to vector<2x8x8xf32>
    %308 = arith.mulf %306, %307 : vector<2x8x8xf32>
    %309 = vector.broadcast %4 : vector<2x1x8xf32> to vector<2x8x8xf32>
    %310 = arith.addf %308, %309 : vector<2x8x8xf32>
    %cst_107 = arith.constant dense<0xFF800000> : vector<2x8xf32>
    %311 = vector.multi_reduction <maximumf>, %310, %cst_107 [2] : vector<2x8x8xf32> to vector<2x8xf32>
    %312 = vector.shape_cast %311 : vector<2x8xf32> to vector<2x8x1xf32>
    %313 = vector.broadcast %312 : vector<2x8x1xf32> to vector<2x8x8xf32>
    %314 = arith.subf %310, %313 : vector<2x8x8xf32>
    %315 = math.exp %314 : vector<2x8x8xf32>
    %cst_108 = arith.constant dense<0.000000e+00> : vector<2x8xf32>
    %316 = vector.multi_reduction <add>, %315, %cst_108 [2] : vector<2x8x8xf32> to vector<2x8xf32>
    %317 = vector.shape_cast %316 : vector<2x8xf32> to vector<2x8x1xf32>
    %318 = tpu.reciprocal %317 {approx = true} : vector<2x8x1xf32> -> vector<2x8x1xf32>
    %319 = vector.broadcast %318 : vector<2x8x1xf32> to vector<2x8x8xf32>
    %320 = arith.mulf %315, %319 : vector<2x8x8xf32>
    %321 = arith.truncf %320 : vector<2x8x8xf32> to vector<2x8x8xbf16>
    "tpu.trace_start"() <{level = 10 : i32, message = "bqk,bkd->bqd"}> : () -> ()
    %cst_109 = arith.constant dense<0.000000e+00> : vector<2x8x16xf32>
    %322 = tpu.matmul %321, %305, %cst_109 {dimension_numbers = #tpu.dot_dimension_numbers<[2], [1], [1], [2], [0, 0, 0, 1, 1, 2], [0], [0]>} : vector<2x8x8xbf16>, vector<2x8x16xbf16>, vector<2x8x16xf32> -> vector<2x8x16xf32>
    "tpu.trace_stop"() : () -> ()
    %323 = vector.extract_strided_slice %249 {offsets = [0, 0, 48], sizes = [2, 8, 16], strides = [1, 1, 1]} : vector<2x8x64xf32> to vector<2x8x16xf32>
    %324 = arith.truncf %323 : vector<2x8x16xf32> to vector<2x8x16xbf16>
    %325 = vector.extract_strided_slice %251 {offsets = [0, 0, 48], sizes = [2, 8, 16], strides = [1, 1, 1]} : vector<2x8x64xf32> to vector<2x8x16xf32>
    %326 = arith.truncf %325 : vector<2x8x16xf32> to vector<2x8x16xbf16>
    %327 = vector.extract_strided_slice %253 {offsets = [0, 0, 48], sizes = [2, 8, 16], strides = [1, 1, 1]} : vector<2x8x64xf32> to vector<2x8x16xf32>
    %328 = arith.truncf %327 : vector<2x8x16xf32> to vector<2x8x16xbf16>
    "tpu.trace_start"() <{level = 10 : i32, message = "bqd,bkd->bqk"}> : () -> ()
    %cst_110 = arith.constant dense<0.000000e+00> : vector<2x8x8xf32>
    %329 = tpu.matmul %324, %326, %cst_110 {dimension_numbers = #tpu.dot_dimension_numbers<[2], [2], [1], [1], [0, 0, 0, 1, 1, 1], [0], [0]>} : vector<2x8x16xbf16>, vector<2x8x16xbf16>, vector<2x8x8xf32> -> vector<2x8x8xf32>
    "tpu.trace_stop"() : () -> ()
    %cst_111 = arith.constant 2.500000e-01 : f32
    %330 = vector.broadcast %cst_111 : f32 to vector<2x8x8xf32>
    %331 = arith.mulf %329, %330 : vector<2x8x8xf32>
    %332 = vector.broadcast %4 : vector<2x1x8xf32> to vector<2x8x8xf32>
    %333 = arith.addf %331, %332 : vector<2x8x8xf32>
    %cst_112 = arith.constant dense<0xFF800000> : vector<2x8xf32>
    %334 = vector.multi_reduction <maximumf>, %333, %cst_112 [2] : vector<2x8x8xf32> to vector<2x8xf32>
    %335 = vector.shape_cast %334 : vector<2x8xf32> to vector<2x8x1xf32>
    %336 = vector.broadcast %335 : vector<2x8x1xf32> to vector<2x8x8xf32>
    %337 = arith.subf %333, %336 : vector<2x8x8xf32>
    %338 = math.exp %337 : vector<2x8x8xf32>
    %cst_113 = arith.constant dense<0.000000e+00> : vector<2x8xf32>
    %339 = vector.multi_reduction <add>, %338, %cst_113 [2] : vector<2x8x8xf32> to vector<2x8xf32>
    %340 = vector.shape_cast %339 : vector<2x8xf32> to vector<2x8x1xf32>
    %341 = tpu.reciprocal %340 {approx = true} : vector<2x8x1xf32> -> vector<2x8x1xf32>
    %342 = vector.broadcast %341 : vector<2x8x1xf32> to vector<2x8x8xf32>
    %343 = arith.mulf %338, %342 : vector<2x8x8xf32>
    %344 = arith.truncf %343 : vector<2x8x8xf32> to vector<2x8x8xbf16>
    "tpu.trace_start"() <{level = 10 : i32, message = "bqk,bkd->bqd"}> : () -> ()
    %cst_114 = arith.constant dense<0.000000e+00> : vector<2x8x16xf32>
    %345 = tpu.matmul %344, %328, %cst_114 {dimension_numbers = #tpu.dot_dimension_numbers<[2], [1], [1], [2], [0, 0, 0, 1, 1, 2], [0], [0]>} : vector<2x8x8xbf16>, vector<2x8x16xbf16>, vector<2x8x16xf32> -> vector<2x8x16xf32>
    "tpu.trace_stop"() : () -> ()
    %346 = tpu.concatenate %276, %299, %322, %345 in 2 : vector<2x8x16xf32>, vector<2x8x16xf32>, vector<2x8x16xf32>, vector<2x8x16xf32> -> vector<2x8x64xf32>
    %347 = vector.shape_cast %346 : vector<2x8x64xf32> to vector<16x64xf32>
    %348 = arith.truncf %347 : vector<16x64xf32> to vector<16x64xbf16>
    %c1_115 = arith.constant 1 : index
    %c0_116 = arith.constant 0 : index
    %c0_117 = arith.constant 0 : index
    %349 = vector.load %arg7[%c1_115, %c0_116, %c0_117] : memref<2x64x64xbf16, #tpu.memory_space<vmem>>, vector<1x64x64xbf16>
    %350 = vector.shape_cast %349 : vector<1x64x64xbf16> to vector<64x64xbf16>
    %cst_118 = arith.constant dense<0.000000e+00> : vector<16x64xf32>
    %351 = tpu.matmul %348, %350, %cst_118 {dimension_numbers = #tpu.dot_dimension_numbers<[1], [0], [0], [1], [0, 0, 1, 1], [], []>} : vector<16x64xbf16>, vector<64x64xbf16>, vector<16x64xf32> -> vector<16x64xf32>
    %c1_119 = arith.constant 1 : index
    %c0_120 = arith.constant 0 : index
    %c0_121 = arith.constant 0 : index
    %352 = vector.load %arg8[%c1_119, %c0_120, %c0_121] : memref<2x1x64xf32, #tpu.memory_space<vmem>>, vector<1x1x64xf32>
    %353 = vector.shape_cast %352 : vector<1x1x64xf32> to vector<1x64xf32>
    %354 = vector.broadcast %353 : vector<1x64xf32> to vector<16x64xf32>
    %355 = arith.addf %351, %354 : vector<16x64xf32>
    %356 = vector.shape_cast %355 : vector<16x64xf32> to vector<2x8x64xf32>
    %357 = arith.addf %238, %356 : vector<2x8x64xf32>
    %c1_122 = arith.constant 1 : index
    %c0_123 = arith.constant 0 : index
    %c0_124 = arith.constant 0 : index
    %358 = vector.load %arg9[%c1_122, %c0_123, %c0_124] : memref<2x1x64xf32, #tpu.memory_space<vmem>>, vector<1x1x64xf32>
    %359 = vector.shape_cast %358 : vector<1x1x64xf32> to vector<1x64xf32>
    %c1_125 = arith.constant 1 : index
    %c0_126 = arith.constant 0 : index
    %c0_127 = arith.constant 0 : index
    %360 = vector.load %arg10[%c1_125, %c0_126, %c0_127] : memref<2x1x64xf32, #tpu.memory_space<vmem>>, vector<1x1x64xf32>
    %361 = vector.shape_cast %360 : vector<1x1x64xf32> to vector<1x64xf32>
    %cst_128 = arith.constant dense<0.000000e+00> : vector<2x8xf32>
    %362 = vector.multi_reduction <add>, %357, %cst_128 [2] : vector<2x8x64xf32> to vector<2x8xf32>
    %363 = vector.shape_cast %362 : vector<2x8xf32> to vector<2x8x1xf32>
    %cst_129 = arith.constant 6.400000e+01 : f32
    %364 = vector.broadcast %cst_129 : f32 to vector<2x8x1xf32>
    %365 = arith.divf %363, %364 : vector<2x8x1xf32>
    %366 = vector.broadcast %365 : vector<2x8x1xf32> to vector<2x8x64xf32>
    %367 = arith.subf %357, %366 : vector<2x8x64xf32>
    %368 = arith.mulf %367, %367 : vector<2x8x64xf32>
    %cst_130 = arith.constant dense<0.000000e+00> : vector<2x8xf32>
    %369 = vector.multi_reduction <add>, %368, %cst_130 [2] : vector<2x8x64xf32> to vector<2x8xf32>
    %370 = vector.shape_cast %369 : vector<2x8xf32> to vector<2x8x1xf32>
    %cst_131 = arith.constant 6.400000e+01 : f32
    %371 = vector.broadcast %cst_131 : f32 to vector<2x8x1xf32>
    %372 = arith.divf %370, %371 : vector<2x8x1xf32>
    %373 = vector.broadcast %365 : vector<2x8x1xf32> to vector<2x8x64xf32>
    %374 = arith.subf %357, %373 : vector<2x8x64xf32>
    %cst_132 = arith.constant 9.99999974E-6 : f32
    %375 = vector.broadcast %cst_132 : f32 to vector<2x8x1xf32>
    %376 = arith.addf %372, %375 : vector<2x8x1xf32>
    %377 = math.rsqrt %376 : vector<2x8x1xf32>
    %378 = vector.broadcast %377 : vector<2x8x1xf32> to vector<2x8x64xf32>
    %379 = arith.mulf %374, %378 : vector<2x8x64xf32>
    %380 = vector.shape_cast %359 : vector<1x64xf32> to vector<1x1x64xf32>
    %381 = vector.broadcast %380 : vector<1x1x64xf32> to vector<2x8x64xf32>
    %382 = arith.mulf %379, %381 : vector<2x8x64xf32>
    %383 = vector.shape_cast %361 : vector<1x64xf32> to vector<1x1x64xf32>
    %384 = vector.broadcast %383 : vector<1x1x64xf32> to vector<2x8x64xf32>
    %385 = arith.addf %382, %384 : vector<2x8x64xf32>
    %386 = vector.shape_cast %385 : vector<2x8x64xf32> to vector<16x64xf32>
    %387 = arith.truncf %386 : vector<16x64xf32> to vector<16x64xbf16>
    %c1_133 = arith.constant 1 : index
    %c0_134 = arith.constant 0 : index
    %c0_135 = arith.constant 0 : index
    %388 = vector.load %arg11[%c1_133, %c0_134, %c0_135] : memref<2x64x128xbf16, #tpu.memory_space<vmem>>, vector<1x64x128xbf16>
    %389 = vector.shape_cast %388 : vector<1x64x128xbf16> to vector<64x128xbf16>
    %cst_136 = arith.constant dense<0.000000e+00> : vector<16x128xf32>
    %390 = tpu.matmul %387, %389, %cst_136 {dimension_numbers = #tpu.dot_dimension_numbers<[1], [0], [0], [1], [0, 0, 1, 1], [], []>} : vector<16x64xbf16>, vector<64x128xbf16>, vector<16x128xf32> -> vector<16x128xf32>
    %c1_137 = arith.constant 1 : index
    %c0_138 = arith.constant 0 : index
    %c0_139 = arith.constant 0 : index
    %391 = vector.load %arg12[%c1_137, %c0_138, %c0_139] : memref<2x1x128xf32, #tpu.memory_space<vmem>>, vector<1x1x128xf32>
    %392 = vector.shape_cast %391 : vector<1x1x128xf32> to vector<1x128xf32>
    %393 = vector.broadcast %392 : vector<1x128xf32> to vector<16x128xf32>
    %394 = arith.addf %390, %393 : vector<16x128xf32>
    %395 = arith.mulf %394, %394 : vector<16x128xf32>
    %396 = arith.mulf %394, %395 : vector<16x128xf32>
    %cst_140 = arith.constant 4.471500e-02 : f32
    %397 = vector.broadcast %cst_140 : f32 to vector<16x128xf32>
    %398 = arith.mulf %397, %396 : vector<16x128xf32>
    %399 = arith.addf %394, %398 : vector<16x128xf32>
    %cst_141 = arith.constant 0.797884583 : f32
    %400 = vector.broadcast %cst_141 : f32 to vector<16x128xf32>
    %401 = arith.mulf %400, %399 : vector<16x128xf32>
    %402 = math.tanh %401 : vector<16x128xf32>
    %cst_142 = arith.constant 1.000000e+00 : f32
    %403 = vector.broadcast %cst_142 : f32 to vector<16x128xf32>
    %404 = arith.addf %403, %402 : vector<16x128xf32>
    %cst_143 = arith.constant 5.000000e-01 : f32
    %405 = vector.broadcast %cst_143 : f32 to vector<16x128xf32>
    %406 = arith.mulf %405, %404 : vector<16x128xf32>
    %407 = arith.mulf %394, %406 : vector<16x128xf32>
    %408 = arith.truncf %407 : vector<16x128xf32> to vector<16x128xbf16>
    %c1_144 = arith.constant 1 : index
    %c0_145 = arith.constant 0 : index
    %c0_146 = arith.constant 0 : index
    %409 = vector.load %arg13[%c1_144, %c0_145, %c0_146] : memref<2x128x64xbf16, #tpu.memory_space<vmem>>, vector<1x128x64xbf16>
    %410 = vector.shape_cast %409 : vector<1x128x64xbf16> to vector<128x64xbf16>
    %cst_147 = arith.constant dense<0.000000e+00> : vector<16x64xf32>
    %411 = tpu.matmul %408, %410, %cst_147 {dimension_numbers = #tpu.dot_dimension_numbers<[1], [0], [0], [1], [0, 0, 1, 1], [], []>} : vector<16x128xbf16>, vector<128x64xbf16>, vector<16x64xf32> -> vector<16x64xf32>
    %c1_148 = arith.constant 1 : index
    %c0_149 = arith.constant 0 : index
    %c0_150 = arith.constant 0 : index
    %412 = vector.load %arg14[%c1_148, %c0_149, %c0_150] : memref<2x1x64xf32, #tpu.memory_space<vmem>>, vector<1x1x64xf32>
    %413 = vector.shape_cast %412 : vector<1x1x64xf32> to vector<1x64xf32>
    %414 = vector.broadcast %413 : vector<1x64xf32> to vector<16x64xf32>
    %415 = arith.addf %411, %414 : vector<16x64xf32>
    %416 = vector.shape_cast %415 : vector<16x64xf32> to vector<2x8x64xf32>
    %417 = arith.addf %385, %416 : vector<2x8x64xf32>
    %c1_151 = arith.constant 1 : index
    %c0_152 = arith.constant 0 : index
    %c0_153 = arith.constant 0 : index
    %418 = vector.load %arg15[%c1_151, %c0_152, %c0_153] : memref<2x1x64xf32, #tpu.memory_space<vmem>>, vector<1x1x64xf32>
    %419 = vector.shape_cast %418 : vector<1x1x64xf32> to vector<1x64xf32>
    %c1_154 = arith.constant 1 : index
    %c0_155 = arith.constant 0 : index
    %c0_156 = arith.constant 0 : index
    %420 = vector.load %arg16[%c1_154, %c0_155, %c0_156] : memref<2x1x64xf32, #tpu.memory_space<vmem>>, vector<1x1x64xf32>
    %421 = vector.shape_cast %420 : vector<1x1x64xf32> to vector<1x64xf32>
    %cst_157 = arith.constant dense<0.000000e+00> : vector<2x8xf32>
    %422 = vector.multi_reduction <add>, %417, %cst_157 [2] : vector<2x8x64xf32> to vector<2x8xf32>
    %423 = vector.shape_cast %422 : vector<2x8xf32> to vector<2x8x1xf32>
    %cst_158 = arith.constant 6.400000e+01 : f32
    %424 = vector.broadcast %cst_158 : f32 to vector<2x8x1xf32>
    %425 = arith.divf %423, %424 : vector<2x8x1xf32>
    %426 = vector.broadcast %425 : vector<2x8x1xf32> to vector<2x8x64xf32>
    %427 = arith.subf %417, %426 : vector<2x8x64xf32>
    %428 = arith.mulf %427, %427 : vector<2x8x64xf32>
    %cst_159 = arith.constant dense<0.000000e+00> : vector<2x8xf32>
    %429 = vector.multi_reduction <add>, %428, %cst_159 [2] : vector<2x8x64xf32> to vector<2x8xf32>
    %430 = vector.shape_cast %429 : vector<2x8xf32> to vector<2x8x1xf32>
    %cst_160 = arith.constant 6.400000e+01 : f32
    %431 = vector.broadcast %cst_160 : f32 to vector<2x8x1xf32>
    %432 = arith.divf %430, %431 : vector<2x8x1xf32>
    %433 = vector.broadcast %425 : vector<2x8x1xf32> to vector<2x8x64xf32>
    %434 = arith.subf %417, %433 : vector<2x8x64xf32>
    %cst_161 = arith.constant 9.99999974E-6 : f32
    %435 = vector.broadcast %cst_161 : f32 to vector<2x8x1xf32>
    %436 = arith.addf %432, %435 : vector<2x8x1xf32>
    %437 = math.rsqrt %436 : vector<2x8x1xf32>
    %438 = vector.broadcast %437 : vector<2x8x1xf32> to vector<2x8x64xf32>
    %439 = arith.mulf %434, %438 : vector<2x8x64xf32>
    %440 = vector.shape_cast %419 : vector<1x64xf32> to vector<1x1x64xf32>
    %441 = vector.broadcast %440 : vector<1x1x64xf32> to vector<2x8x64xf32>
    %442 = arith.mulf %439, %441 : vector<2x8x64xf32>
    %443 = vector.shape_cast %421 : vector<1x64xf32> to vector<1x1x64xf32>
    %444 = vector.broadcast %443 : vector<1x1x64xf32> to vector<2x8x64xf32>
    %445 = arith.addf %442, %444 : vector<2x8x64xf32>
    "tpu.trace_start"() <{level = 10 : i32, message = "bql,blh->bqh"}> : () -> ()
    %cst_162 = arith.constant dense<0.000000e+00> : vector<2x1x64xf32>
    %446 = tpu.matmul %0, %445, %cst_162 {dimension_numbers = #tpu.dot_dimension_numbers<[2], [1], [1], [2], [0, 0, 0, 1, 1, 2], [0], [0]>} : vector<2x1x8xf32>, vector<2x8x64xf32>, vector<2x1x64xf32> -> vector<2x1x64xf32>
    "tpu.trace_stop"() : () -> ()
    %cst_163 = arith.constant dense<0.000000e+00> : vector<2x1xf32>
    %447 = vector.multi_reduction <add>, %0, %cst_163 [2] : vector<2x1x8xf32> to vector<2x1xf32>
    %448 = vector.shape_cast %447 : vector<2x1xf32> to vector<2x1x1xf32>
    %cst_164 = arith.constant 9.99999971E-10 : f32
    %449 = vector.broadcast %cst_164 : f32 to vector<2x1x1xf32>
    %450 = arith.maximumf %448, %449 : vector<2x1x1xf32>
    %451 = vector.broadcast %450 : vector<2x1x1xf32> to vector<2x1x64xf32>
    %452 = arith.divf %446, %451 : vector<2x1x64xf32>
    %453 = vector.shape_cast %452 : vector<2x1x64xf32> to vector<2x64xf32>
    %c0_165 = arith.constant 0 : index
    %c0_166 = arith.constant 0 : index
    %454 = vector.load %arg17[%c0_165, %c0_166] : memref<64x128xf32, #tpu.memory_space<vmem>>, vector<64x128xf32>
    %cst_167 = arith.constant dense<0.000000e+00> : vector<2x128xf32>
    %455 = tpu.matmul %453, %454, %cst_167 {dimension_numbers = #tpu.dot_dimension_numbers<[1], [0], [0], [1], [0, 0, 1, 1], [], []>} : vector<2x64xf32>, vector<64x128xf32>, vector<2x128xf32> -> vector<2x128xf32>
    %c0_168 = arith.constant 0 : index
    %c0_169 = arith.constant 0 : index
    %456 = vector.load %arg18[%c0_168, %c0_169] : memref<1x128xf32, #tpu.memory_space<vmem>>, vector<1x128xf32>
    %457 = vector.broadcast %456 : vector<1x128xf32> to vector<2x128xf32>
    %458 = arith.addf %455, %457 : vector<2x128xf32>
    %c0_170 = arith.constant 0 : index
    %c0_171 = arith.constant 0 : index
    %459 = vector.load %arg19[%c0_170, %c0_171] : memref<2x128xf32, #tpu.memory_space<vmem>>, vector<2x128xf32>
    tpu.vector_store %arg19[%c0_170, %c0_171], %458 {strides = array<i32>} : memref<2x128xf32, #tpu.memory_space<vmem>>, vector<2x128xf32>,
    return
  }
  func.func @transform_0(%arg0: i32) -> (i32, i32, i32) {
    %c0_i32 = arith.constant 0 : i32
    %c0_i32_0 = arith.constant 0 : i32
    %c0_i32_1 = arith.constant 0 : i32
    %c0_i32_2 = arith.constant 0 : i32
    return %c0_i32, %c0_i32_0, %c0_i32_1 : i32, i32, i32
  }
  func.func @transform_1(%arg0: i32) -> (i32, i32, i32) {
    %c0_i32 = arith.constant 0 : i32
    %c0_i32_0 = arith.constant 0 : i32
    %c0_i32_1 = arith.constant 0 : i32
    %c0_i32_2 = arith.constant 0 : i32
    return %c0_i32, %c0_i32_0, %c0_i32_1 : i32, i32, i32
  }
  func.func @transform_2(%arg0: i32) -> (i32, i32) {
    %c0_i32 = arith.constant 0 : i32
    %c0_i32_0 = arith.constant 0 : i32
    %c0_i32_1 = arith.constant 0 : i32
    return %c0_i32, %c0_i32_0 : i32, i32
  }
  func.func @transform_3(%arg0: i32) -> (i32, i32) {
    %c0_i32 = arith.constant 0 : i32
    %c0_i32_0 = arith.constant 0 : i32
    %c0_i32_1 = arith.constant 0 : i32
    return %c0_i32, %c0_i32_0 : i32, i32
  }
  func.func @transform_4(%arg0: i32) -> (i32, i32, i32) {
    %c0_i32 = arith.constant 0 : i32
    %c0_i32_0 = arith.constant 0 : i32
    %c0_i32_1 = arith.constant 0 : i32
    %c0_i32_2 = arith.constant 0 : i32
    return %c0_i32, %c0_i32_0, %c0_i32_1 : i32, i32, i32
  }
  func.func @transform_5(%arg0: i32) -> (i32, i32, i32) {
    %c0_i32 = arith.constant 0 : i32
    %c0_i32_0 = arith.constant 0 : i32
    %c0_i32_1 = arith.constant 0 : i32
    %c0_i32_2 = arith.constant 0 : i32
    return %c0_i32, %c0_i32_0, %c0_i32_1 : i32, i32, i32
  }
  func.func @transform_6(%arg0: i32) -> (i32, i32, i32) {
    %c0_i32 = arith.constant 0 : i32
    %c0_i32_0 = arith.constant 0 : i32
    %c0_i32_1 = arith.constant 0 : i32
    %c0_i32_2 = arith.constant 0 : i32
    return %c0_i32, %c0_i32_0, %c0_i32_1 : i32, i32, i32
  }
  func.func @transform_7(%arg0: i32) -> (i32, i32, i32) {
    %c0_i32 = arith.constant 0 : i32
    %c0_i32_0 = arith.constant 0 : i32
    %c0_i32_1 = arith.constant 0 : i32
    %c0_i32_2 = arith.constant 0 : i32
    return %c0_i32, %c0_i32_0, %c0_i32_1 : i32, i32, i32
  }
  func.func @transform_8(%arg0: i32) -> (i32, i32, i32) {
    %c0_i32 = arith.constant 0 : i32
    %c0_i32_0 = arith.constant 0 : i32
    %c0_i32_1 = arith.constant 0 : i32
    %c0_i32_2 = arith.constant 0 : i32
    return %c0_i32, %c0_i32_0, %c0_i32_1 : i32, i32, i32
  }
  func.func @transform_9(%arg0: i32) -> (i32, i32, i32) {
    %c0_i32 = arith.constant 0 : i32
    %c0_i32_0 = arith.constant 0 : i32
    %c0_i32_1 = arith.constant 0 : i32
    %c0_i32_2 = arith.constant 0 : i32
    return %c0_i32, %c0_i32_0, %c0_i32_1 : i32, i32, i32
  }
  func.func @transform_10(%arg0: i32) -> (i32, i32, i32) {
    %c0_i32 = arith.constant 0 : i32
    %c0_i32_0 = arith.constant 0 : i32
    %c0_i32_1 = arith.constant 0 : i32
    %c0_i32_2 = arith.constant 0 : i32
    return %c0_i32, %c0_i32_0, %c0_i32_1 : i32, i32, i32
  }
  func.func @transform_11(%arg0: i32) -> (i32, i32, i32) {
    %c0_i32 = arith.constant 0 : i32
    %c0_i32_0 = arith.constant 0 : i32
    %c0_i32_1 = arith.constant 0 : i32
    %c0_i32_2 = arith.constant 0 : i32
    return %c0_i32, %c0_i32_0, %c0_i32_1 : i32, i32, i32
  }
  func.func @transform_12(%arg0: i32) -> (i32, i32, i32) {
    %c0_i32 = arith.constant 0 : i32
    %c0_i32_0 = arith.constant 0 : i32
    %c0_i32_1 = arith.constant 0 : i32
    %c0_i32_2 = arith.constant 0 : i32
    return %c0_i32, %c0_i32_0, %c0_i32_1 : i32, i32, i32
  }
  func.func @transform_13(%arg0: i32) -> (i32, i32, i32) {
    %c0_i32 = arith.constant 0 : i32
    %c0_i32_0 = arith.constant 0 : i32
    %c0_i32_1 = arith.constant 0 : i32
    %c0_i32_2 = arith.constant 0 : i32
    return %c0_i32, %c0_i32_0, %c0_i32_1 : i32, i32, i32
  }
  func.func @transform_14(%arg0: i32) -> (i32, i32, i32) {
    %c0_i32 = arith.constant 0 : i32
    %c0_i32_0 = arith.constant 0 : i32
    %c0_i32_1 = arith.constant 0 : i32
    %c0_i32_2 = arith.constant 0 : i32
    return %c0_i32, %c0_i32_0, %c0_i32_1 : i32, i32, i32
  }
  func.func @transform_15(%arg0: i32) -> (i32, i32, i32) {
    %c0_i32 = arith.constant 0 : i32
    %c0_i32_0 = arith.constant 0 : i32
    %c0_i32_1 = arith.constant 0 : i32
    %c0_i32_2 = arith.constant 0 : i32
    return %c0_i32, %c0_i32_0, %c0_i32_1 : i32, i32, i32
  }
  func.func @transform_16(%arg0: i32) -> (i32, i32) {
    %c0_i32 = arith.constant 0 : i32
    %c0_i32_0 = arith.constant 0 : i32
    %c0_i32_1 = arith.constant 0 : i32
    return %c0_i32, %c0_i32_0 : i32, i32
  }
  func.func @transform_17(%arg0: i32) -> (i32, i32) {
    %c0_i32 = arith.constant 0 : i32
    %c0_i32_0 = arith.constant 0 : i32
    %c0_i32_1 = arith.constant 0 : i32
    return %c0_i32, %c0_i32_0 : i32, i32
  }
  func.func @transform_18(%arg0: i32) -> (i32, i32) {
    %c0_i32 = arith.constant 0 : i32
    %c0_i32_0 = arith.constant 0 : i32
    %c0_i32_1 = arith.constant 0 : i32
    return %c0_i32, %c0_i32_0 : i32, i32
  }
}

</mosaic_0001>

<llo_original>
// kernel: deberta_forward.1
$region0: #{deberta_forward.1}
  #allocation0 [shape = 'u32[]', space=smem, size = 0x4, offset = 0x4, fixed_abs, tag = 'smem constant byte address 0x4 - core index']
  #allocation1 [shape = 'u32[72,128]{1,0:T(1,128)}', space=vmem, size = 0x9000, scoped, tag = 'internal scratch']
  %s0 = inlined_call_operand.vmem [shape: f32[2,8,64], index: 0, kind: input, shape index: {}]
  %s1 = inlined_call_operand.vmem [shape: f32[2,1,8], index: 1, kind: input, shape index: {}]
  %s2 = inlined_call_operand.vmem [shape: f32[1,64], index: 2, kind: input, shape index: {}]
  %s3 = inlined_call_operand.vmem [shape: f32[1,64], index: 3, kind: input, shape index: {}]
  %s4 = inlined_call_operand.vmem [shape: bf16[2,64,192], index: 4, kind: input, shape index: {}]
  %s5 = inlined_call_operand.vmem [shape: f32[2,1,192], index: 5, kind: input, shape index: {}]
  %s6 = inlined_call_operand.vmem [shape: bf16[2,64,64], index: 6, kind: input, shape index: {}]
  %s7 = inlined_call_operand.vmem [shape: f32[2,1,64], index: 7, kind: input, shape index: {}]
  %s8 = inlined_call_operand.vmem [shape: f32[2,1,64], index: 8, kind: input, shape index: {}]
  %s9 = inlined_call_operand.vmem [shape: f32[2,1,64], index: 9, kind: input, shape index: {}]
  %s10 = inlined_call_operand.vmem [shape: bf16[2,64,128], index: 10, kind: input, shape index: {}]
  %s11 = inlined_call_operand.vmem [shape: f32[2,1,128], index: 11, kind: input, shape index: {}]
  %s12 = inlined_call_operand.vmem [shape: bf16[2,128,64], index: 12, kind: input, shape index: {}]
  %s13 = inlined_call_operand.vmem [shape: f32[2,1,64], index: 13, kind: input, shape index: {}]
  %s14 = inlined_call_operand.vmem [shape: f32[2,1,64], index: 14, kind: input, shape index: {}]
  %s15 = inlined_call_operand.vmem [shape: f32[2,1,64], index: 15, kind: input, shape index: {}]
  %s16 = inlined_call_operand.vmem [shape: f32[64,128], index: 16, kind: input, shape index: {}]
  %s17 = inlined_call_operand.vmem [shape: f32[1,128], index: 17, kind: input, shape index: {}]
  %s18 = inlined_call_operand.hbm [shape: f32[2,128], index: 18, kind: output, shape index: {}]
  %s19 = sld [smem:[#allocation0]]
  $region82: #{deberta_forward.1} parent=0
    _
  %s21 = ssub.s32 1, %s19
  %s22 = scalar_select 0, %s21, %s19
  $region1: #{deberta_forward.1} parent=0
    #allocation2 [shape = 'u8[1024]{0}', space=vmem, size = 0x400, scoped, tag = 'output window, operand 0, single buffered']
    #allocation3 [shape = 's32[1]{0}', space=sflag, size = 0x4, scoped, tag = 'scoped memory for deberta_forward.1']
    %23 = vsyncpa [#allocation3], 0
    // Predicated region
    $region2: #{deberta_forward.1} parent=1 // pred_check
      _
    $region3: #{deberta_forward.1} parent=1 // pred_check_branch
      %25 = sbr.rel (0) target = $region5
    $region4: #{deberta_forward.1} parent=1 // pred_region
      _
    $region5: #{deberta_forward.1} parent=1 // pred_fallthru
      _
    // Predicated region
    $region6: #{deberta_forward.1} parent=1 // pred_check
      _
    $region7: #{deberta_forward.1} parent=1 // pred_check_branch
      %27 = sbr.rel (0) target = $region9
    $region8: #{deberta_forward.1} parent=1 // pred_region
      _
    $region9: #{deberta_forward.1} parent=1 // pred_fallthru
      _
    // Predicated region
    $region10: #{deberta_forward.1} parent=1 // pred_check
      _
    $region11: #{deberta_forward.1} parent=1 // pred_check_branch
      %29 = sbr.rel (0) target = $region13
    $region12: #{deberta_forward.1} parent=1 // pred_region
      _
    $region13: #{deberta_forward.1} parent=1 // pred_fallthru
      _
    // Predicated region
    $region14: #{deberta_forward.1} parent=1 // pred_check
      _
    $region15: #{deberta_forward.1} parent=1 // pred_check_branch
      %31 = sbr.rel (0) target = $region17
    $region16: #{deberta_forward.1} parent=1 // pred_region
      _
    $region17: #{deberta_forward.1} parent=1 // pred_fallthru
      _
    // Predicated region
    $region18: #{deberta_forward.1} parent=1 // pred_check
      _
    $region19: #{deberta_forward.1} parent=1 // pred_check_branch
      %33 = sbr.rel (0) target = $region21
    $region20: #{deberta_forward.1} parent=1 // pred_region
      _
    $region21: #{deberta_forward.1} parent=1 // pred_fallthru
      _
    // Predicated region
    $region22: #{deberta_forward.1} parent=1 // pred_check
      _
    $region23: #{deberta_forward.1} parent=1 // pred_check_branch
      %35 = sbr.rel (0) target = $region25
    $region24: #{deberta_forward.1} parent=1 // pred_region
      _
    $region25: #{deberta_forward.1} parent=1 // pred_fallthru
      _
    // Predicated region
    $region26: #{deberta_forward.1} parent=1 // pred_check
      _
    $region27: #{deberta_forward.1} parent=1 // pred_check_branch
      %37 = sbr.rel (0) target = $region29
    $region28: #{deberta_forward.1} parent=1 // pred_region
      _
    $region29: #{deberta_forward.1} parent=1 // pred_fallthru
      _
    // Predicated region
    $region30: #{deberta_forward.1} parent=1 // pred_check
      _
    $region31: #{deberta_forward.1} parent=1 // pred_check_branch
      %39 = sbr.rel (0) target = $region33
    $region32: #{deberta_forward.1} parent=1 // pred_region
      _
    $region33: #{deberta_forward.1} parent=1 // pred_fallthru
      _
    // Predicated region
    $region34: #{deberta_forward.1} parent=1 // pred_check
      _
    $region35: #{deberta_forward.1} parent=1 // pred_check_branch
      %41 = sbr.rel (0) target = $region37
    $region36: #{deberta_forward.1} parent=1 // pred_region
      _
    $region37: #{deberta_forward.1} parent=1 // pred_fallthru
      _
    // Predicated region
    $region38: #{deberta_forward.1} parent=1 // pred_check
      _
    $region39: #{deberta_forward.1} parent=1 // pred_check_branch
      %43 = sbr.rel (0) target = $region41
    $region40: #{deberta_forward.1} parent=1 // pred_region
      _
    $region41: #{deberta_forward.1} parent=1 // pred_fallthru
      _
    // Predicated region
    $region42: #{deberta_forward.1} parent=1 // pred_check
      _
    $region43: #{deberta_forward.1} parent=1 // pred_check_branch
      %45 = sbr.rel (0) target = $region45
    $region44: #{deberta_forward.1} parent=1 // pred_region
      _
    $region45: #{deberta_forward.1} parent=1 // pred_fallthru
      _
    // Predicated region
    $region46: #{deberta_forward.1} parent=1 // pred_check
      _
    $region47: #{deberta_forward.1} parent=1 // pred_check_branch
      %47 = sbr.rel (0) target = $region49
    $region48: #{deberta_forward.1} parent=1 // pred_region
      _
    $region49: #{deberta_forward.1} parent=1 // pred_fallthru
      _
    // Predicated region
    $region50: #{deberta_forward.1} parent=1 // pred_check
      _
    $region51: #{deberta_forward.1} parent=1 // pred_check_branch
      %49 = sbr.rel (0) target = $region53
    $region52: #{deberta_forward.1} parent=1 // pred_region
      _
    $region53: #{deberta_forward.1} parent=1 // pred_fallthru
      _
    // Predicated region
    $region54: #{deberta_forward.1} parent=1 // pred_check
      _
    $region55: #{deberta_forward.1} parent=1 // pred_check_branch
      %51 = sbr.rel (0) target = $region57
    $region56: #{deberta_forward.1} parent=1 // pred_region
      _
    $region57: #{deberta_forward.1} parent=1 // pred_fallthru
      _
    // Predicated region
    $region58: #{deberta_forward.1} parent=1 // pred_check
      _
    $region59: #{deberta_forward.1} parent=1 // pred_check_branch
      %53 = sbr.rel (0) target = $region61
    $region60: #{deberta_forward.1} parent=1 // pred_region
      _
    $region61: #{deberta_forward.1} parent=1 // pred_fallthru
      _
    // Predicated region
    $region62: #{deberta_forward.1} parent=1 // pred_check
      _
    $region63: #{deberta_forward.1} parent=1 // pred_check_branch
      %55 = sbr.rel (0) target = $region65
    $region64: #{deberta_forward.1} parent=1 // pred_region
      _
    $region65: #{deberta_forward.1} parent=1 // pred_fallthru
      _
    // Predicated region
    $region66: #{deberta_forward.1} parent=1 // pred_check
      _
    $region67: #{deberta_forward.1} parent=1 // pred_check_branch
      %57 = sbr.rel (0) target = $region69
    $region68: #{deberta_forward.1} parent=1 // pred_region
      _
    $region69: #{deberta_forward.1} parent=1 // pred_fallthru
      _
    // Predicated region
    $region70: #{deberta_forward.1} parent=1 // pred_check
      _
    $region71: #{deberta_forward.1} parent=1 // pred_check_branch
      %59 = sbr.rel (0) target = $region73
    $region72: #{deberta_forward.1} parent=1 // pred_region
      _
    $region73: #{deberta_forward.1} parent=1 // pred_fallthru
      _
    %v61 = vld [vmem:[%s1] sm:$0x1]
    %v62 = vld [vmem:[%s1 + $0x1] sm:$0x1]
    %v63 = vsub.f32 1.0, %v61
    %v64 = vsub.f32 1.0, %v62
    %v65 = vmul.f32 %v63, -1e+09
    %v66 = vmul.f32 %v64, -1e+09
    %v67 = vld [vmem:[%s0] sm:$0xff]
    %v68 = vld [vmem:[%s0 + $0x8] sm:$0xff]
    %v69 = vld [vmem:[%s2] sm:$0x1]
    %v70 = vld [vmem:[%s3] sm:$0x1]
    %vm71 = vcmask 523264
    %v72 = vsel %vm71, %v67, 0.0
    %73 = vadd.xlane.f32.xlu0 %v72
    %v74 = vpop.xlane.xlu0 %73
    %v75 = vsel %vm71, %v68, 0.0
    %76 = vadd.xlane.f32.xlu0 %v75
    %v77 = vpop.xlane.xlu0 %76
    %v78 = vrcp.pop 64.0
    %v79 = vmul.f32 64.0, %v78
    %v80 = vsub.f32 1.0, %v79
    %v81 = vmul.f32 %v78, %v80
    %v82 = vadd.f32 %v78, %v81
    %vm83 = vweird.f32 %v78
    %v84 = vsel %vm83, %v78, %v82
    %v85 = vmul.f32 %v74, %v84
    %v86 = vmul.f32 %v77, %v84
    %v87 = vsub.f32 %v67, %v85
    %v88 = vsub.f32 %v68, %v86
    %v89 = vmul.f32 %v87, %v87
    %v90 = vmul.f32 %v88, %v88
    %v91 = vsel %vm71, %v89, 0.0
    %92 = vadd.xlane.f32.xlu0 %v91
    %v93 = vpop.xlane.xlu0 %92
    %v94 = vsel %vm71, %v90, 0.0
    %95 = vadd.xlane.f32.xlu0 %v94
    %v96 = vpop.xlane.xlu0 %95
    %v97 = vmul.f32 %v93, %v84
    %v98 = vmul.f32 %v96, %v84
    %v99 = vadd.f32 %v97, 1e-05
    %v100 = vadd.f32 %v98, 1e-05
    %v101 = vrsqrt.pop %v99
    %v102 = vmul.f32 %v101, %v99
    %v103 = vmul.f32 %v102, %v101
    %v104 = vmul.f32 0.5, %v103
    %v105 = vsub.f32 1.5, %v104
    %v106 = vmul.f32 %v101, %v105
    %vm107 = vweird.f32 %v99
    %vm108 = vweird.f32 %v101
    %vm109 = vmor %vm107, %vm108
    %v110 = vsel %vm109, %v101, %v106
    %v111 = vrsqrt.pop %v100
    %v112 = vmul.f32 %v111, %v100
    %v113 = vmul.f32 %v112, %v111
    %v114 = vmul.f32 0.5, %v113
    %v115 = vsub.f32 1.5, %v114
    %v116 = vmul.f32 %v111, %v115
    %vm117 = vweird.f32 %v100
    %vm118 = vweird.f32 %v111
    %vm119 = vmor %vm117, %vm118
    %v120 = vsel %vm119, %v111, %v116
    %v121 = vmul.f32 %v87, %v110
    %v122 = vmul.f32 %v88, %v120
    %v124 = vperm.slane %v69, 0
    %v126 = vmul.f32 %v121, %v124
    %v127 = vmul.f32 %v122, %v124
    %v129 = vperm.slane %v70, 0
    %v131 = vadd.f32 %v126, %v129
    %v132 = vadd.f32 %v127, %v129
    %v133 = vpack.c.bf16 %v132, %v131
    %v134 = vld [vmem:[%s4] sm:$0xff]
    %v135 = vld [vmem:[%s4 + $0x8] sm:$0xff]
    %v136 = vld [vmem:[%s4 + $0x10] sm:$0xff]
    %v137 = vld [vmem:[%s4 + $0x18] sm:$0xff]
    %v138 = vld [vmem:[%s4 + $0x20] sm:$0xff]
    %v139 = vld [vmem:[%s4 + $0x28] sm:$0xff]
    %v140 = vld [vmem:[%s4 + $0x30] sm:$0xff]
    %v141 = vld [vmem:[%s4 + $0x38] sm:$0xff]
    %v142 = vld [vmem:[%s5] sm:$0x3]
    %v144 = vperm.slane %v142, 0
    %v145 = vperm.slane %v142, 1
    %v156 = vunpack.c.l.b16 %v134
    %v157 = vunpack.c.h.b16 %v134
    %v158 = vunpack.c.l.b16 %v135
    %v159 = vunpack.c.h.b16 %v135
    %v160 = vunpack.c.l.b16 %v136
    %v161 = vunpack.c.h.b16 %v136
    %v162 = vunpack.c.l.b16 %v137
    %v163 = vunpack.c.h.b16 %v137
    %v164 = vunpack.c.l.b16 %v138
    %v165 = vunpack.c.h.b16 %v138
    %v166 = vunpack.c.l.b16 %v139
    %v167 = vunpack.c.h.b16 %v139
    %v168 = vunpack.c.l.b16 %v140
    %v169 = vunpack.c.h.b16 %v140
    %v170 = vunpack.c.l.b16 %v141
    %v171 = vunpack.c.h.b16 %v141
    %v172 = vpack.c.b16 %v158, %v156
    %v173 = vpack.c.b16 %v159, %v157
    %v174 = vpack.c.b16 %v162, %v160
    %v175 = vpack.c.b16 %v163, %v161
    %v176 = vpack.c.b16 %v166, %v164
    %v177 = vpack.c.b16 %v167, %v165
    %v178 = vpack.c.b16 %v170, %v168
    %v179 = vpack.c.b16 %v171, %v169
    %v189 = vsel %vm71, %v133, 0
    %191 = vmatpush.bf16.msra.mxu0 0
    %192 = vmatpush.bf16.msra.mxu0 0
    %193 = vmatpush.bf16.msra.mxu0 0
    %194 = vmatpush.bf16.msra.mxu0 0
    %195 = vmatpush.bf16.msra.mxu0 %v178
    %196 = vmatpush.bf16.msra.mxu0 %v176
    %197 = vmatpush.bf16.msra.mxu0 %v174
    %198 = vmatpush.bf16.msra.mxu0 %v172
    %199 = vmatmul.bf16.gmra.mxu0 %v189
    %v200 = vpop.f32.mrf.mxu0
    %v201 = vadd.f32 %v144, %v200
    %v202 = vpop.f32.mrf.mxu0
    %v203 = vadd.f32 %v144, %v202
    %204 = vdwg.mxu0
    %205 = vmatpush.bf16.msra.mxu0 0
    %206 = vmatpush.bf16.msra.mxu0 0
    %207 = vmatpush.bf16.msra.mxu0 0
    %208 = vmatpush.bf16.msra.mxu0 0
    %209 = vmatpush.bf16.msra.mxu0 %v179
    %210 = vmatpush.bf16.msra.mxu0 %v177
    %211 = vmatpush.bf16.msra.mxu0 %v175
    %212 = vmatpush.bf16.msra.mxu0 %v173
    %213 = vmatmul.bf16.gmra.mxu0 %v189
    %v214 = vpop.f32.mrf.mxu0
    %v215 = vadd.f32 %v145, %v214
    %v216 = vpop.f32.mrf.mxu0
    %v217 = vadd.f32 %v145, %v216
    %218 = vdwg.mxu0
    %v219 = vpack.c.bf16 %v201, %v201
    %v220 = vpack.c.bf16 %v203, %v203
    %v221 = vpack.c.bf16 %v215, %v215
    %v222 = vpack.c.bf16 %v217, %v217
    %v224 = vunpack.c.l.b16 %v219
    %v225 = vpack.c.b16 %v224, %v224
    %226 = vrot.lane.b32.xlu0 %v225, 64
    %v227 = vpop.permute.xlu0 %226
    %vm228 = vcmask 130048
    %v230 = vsel %vm228, %v219, 0
    %v233 = vsel %vm228, %v227, 0
    %235 = vmatpush.bf16.xpose.msra.mxu0 0
    %236 = vmatpush.bf16.xpose.msra.mxu0 0
    %237 = vmatpush.bf16.xpose.msra.mxu0 0
    %238 = vmatpush.bf16.xpose.msra.mxu0 0
    %239 = vmatpush.bf16.xpose.msra.mxu0 0
    %240 = vmatpush.bf16.xpose.msra.mxu0 0
    %241 = vmatpush.bf16.xpose.msra.mxu0 0
    %242 = vmatpush.bf16.xpose.msra.mxu0 %v233
    %243 = vmatmul.bf16.gmra.mxu0 %v230
    %v244 = vpop.f32.mrf.mxu0
    %v245 = vadd.f32 0.0, %v244
    %v246 = vpop.f32.mrf.mxu0
    %247 = vdwg.mxu0
    %v249 = vunpack.c.l.b16 %v220
    %v250 = vpack.c.b16 %v249, %v249
    %251 = vrot.lane.b32.xlu0 %v250, 64
    %v252 = vpop.permute.xlu0 %251
    %v254 = vsel %vm228, %v220, 0
    %v257 = vsel %vm228, %v252, 0
    %259 = vmatpush.bf16.xpose.msra.mxu0 0
    %260 = vmatpush.bf16.xpose.msra.mxu0 0
    %261 = vmatpush.bf16.xpose.msra.mxu0 0
    %262 = vmatpush.bf16.xpose.msra.mxu0 0
    %263 = vmatpush.bf16.xpose.msra.mxu0 0
    %264 = vmatpush.bf16.xpose.msra.mxu0 0
    %265 = vmatpush.bf16.xpose.msra.mxu0 0
    %266 = vmatpush.bf16.xpose.msra.mxu0 %v257
    %267 = vmatmul.bf16.gmra.mxu0 %v254
    %v268 = vpop.f32.mrf.mxu0
    %v269 = vadd.f32 0.0, %v268
    %v270 = vpop.f32.mrf.mxu0
    %271 = vdwg.mxu0
    %v272 = vmul.f32 %v245, 0.25
    %v273 = vmul.f32 %v269, 0.25
    %v276 = vperm.slane %v65, 0
    %v277 = vperm.slane %v66, 0
    %v280 = vadd.f32 %v272, %v276
    %v281 = vadd.f32 %v273, %v277
    %vm282 = vcmask 64512
    %v283 = vsel %vm282, %v280, -inf
    %284 = vmax.xlane.f32.xlu0 %v283
    %v285 = vpop.xlane.xlu0 %284
    %v286 = vsel %vm282, %v281, -inf
    %287 = vmax.xlane.f32.xlu0 %v286
    %v288 = vpop.xlane.xlu0 %287
    %v289 = vsub.f32 %v280, %v285
    %v290 = vsub.f32 %v281, %v288
    %v291 = vmul.f32 %v289, 1.442695
    %v292 = vpow.pop %v291
    %v293 = vmul.f32 %v290, 1.442695
    %v294 = vpow.pop %v293
    %v295 = vsel %vm282, %v292, 0.0
    %296 = vadd.xlane.f32.xlu0 %v295
    %v297 = vpop.xlane.xlu0 %296
    %v298 = vsel %vm282, %v294, 0.0
    %299 = vadd.xlane.f32.xlu0 %v298
    %v300 = vpop.xlane.xlu0 %299
    %v301 = vrcp.pop %v297
    %v302 = vrcp.pop %v300
    %v303 = vmul.f32 %v292, %v301
    %v304 = vmul.f32 %v294, %v302
    %v305 = vpack.c.bf16 %v303, %v303
    %v306 = vpack.c.bf16 %v304, %v304
    %v308 = vsel %vm282, %v305, 0
    %vm310 = vcmask 1043456
    %v312 = vsel %vm310, %v221, 0
    %314 = vmatpush.bf16.msra.mxu0 0
    %315 = vmatpush.bf16.msra.mxu0 0
    %316 = vmatpush.bf16.msra.mxu0 0
    %317 = vmatpush.bf16.msra.mxu0 0
    %318 = vmatpush.bf16.msra.mxu0 0
    %319 = vmatpush.bf16.msra.mxu0 0
    %320 = vmatpush.bf16.msra.mxu0 0
    %321 = vmatpush.bf16.msra.mxu0 %v312
    %322 = vmatmul.bf16.gmra.mxu0 %v308
    %v323 = vpop.f32.mrf.mxu0
    %v324 = vadd.f32 0.0, %v323
    %v325 = vpop.f32.mrf.mxu0
    %326 = vdwg.mxu0
    %v328 = vsel %vm282, %v306, 0
    %v331 = vsel %vm310, %v222, 0
    %333 = vmatpush.bf16.msra.mxu0 0
    %334 = vmatpush.bf16.msra.mxu0 0
    %335 = vmatpush.bf16.msra.mxu0 0
    %336 = vmatpush.bf16.msra.mxu0 0
    %337 = vmatpush.bf16.msra.mxu0 0
    %338 = vmatpush.bf16.msra.mxu0 0
    %339 = vmatpush.bf16.msra.mxu0 0
    %340 = vmatpush.bf16.msra.mxu0 %v331
    %341 = vmatmul.bf16.gmra.mxu0 %v328
    %v342 = vpop.f32.mrf.mxu0
    %v343 = vadd.f32 0.0, %v342
    %v344 = vpop.f32.mrf.mxu0
    %345 = vdwg.mxu0
    %346 = vrot.lane.b32.xlu0 %v225, 112
    %v347 = vpop.permute.xlu0 %346
    %348 = vrot.lane.b32.xlu0 %v225, 48
    %v349 = vpop.permute.xlu0 %348
    %v351 = vsel %vm228, %v347, 0
    %v354 = vsel %vm228, %v349, 0
    %356 = vmatpush.bf16.xpose.msra.mxu0 0
    %357 = vmatpush.bf16.xpose.msra.mxu0 0
    %358 = vmatpush.bf16.xpose.msra.mxu0 0
    %359 = vmatpush.bf16.xpose.msra.mxu0 0
    %360 = vmatpush.bf16.xpose.msra.mxu0 0
    %361 = vmatpush.bf16.xpose.msra.mxu0 0
    %362 = vmatpush.bf16.xpose.msra.mxu0 0
    %363 = vmatpush.bf16.xpose.msra.mxu0 %v354
    %364 = vmatmul.bf16.gmra.mxu0 %v351
    %v365 = vpop.f32.mrf.mxu0
    %v366 = vadd.f32 0.0, %v365
    %v367 = vpop.f32.mrf.mxu0
    %368 = vdwg.mxu0
    %369 = vrot.lane.b32.xlu0 %v250, 112
    %v370 = vpop.permute.xlu0 %369
    %371 = vrot.lane.b32.xlu0 %v250, 48
    %v372 = vpop.permute.xlu0 %371
    %v374 = vsel %vm228, %v370, 0
    %v377 = vsel %vm228, %v372, 0
    %379 = vmatpush.bf16.xpose.msra.mxu0 0
    %380 = vmatpush.bf16.xpose.msra.mxu0 0
    %381 = vmatpush.bf16.xpose.msra.mxu0 0
    %382 = vmatpush.bf16.xpose.msra.mxu0 0
    %383 = vmatpush.bf16.xpose.msra.mxu0 0
    %384 = vmatpush.bf16.xpose.msra.mxu0 0
    %385 = vmatpush.bf16.xpose.msra.mxu0 0
    %386 = vmatpush.bf16.xpose.msra.mxu0 %v377
    %387 = vmatmul.bf16.gmra.mxu0 %v374
    %v388 = vpop.f32.mrf.mxu0
    %v389 = vadd.f32 0.0, %v388
    %v390 = vpop.f32.mrf.mxu0
    %391 = vdwg.mxu0
    %v392 = vmul.f32 %v366, 0.25
    %v393 = vmul.f32 %v389, 0.25
    %v394 = vadd.f32 %v392, %v276
    %v395 = vadd.f32 %v393, %v277
    %v396 = vsel %vm282, %v394, -inf
    %397 = vmax.xlane.f32.xlu0 %v396
    %v398 = vpop.xlane.xlu0 %397
    %v399 = vsel %vm282, %v395, -inf
    %400 = vmax.xlane.f32.xlu0 %v399
    %v401 = vpop.xlane.xlu0 %400
    %v402 = vsub.f32 %v394, %v398
    %v403 = vsub.f32 %v395, %v401
    %v404 = vmul.f32 %v402, 1.442695
    %v405 = vpow.pop %v404
    %v406 = vmul.f32 %v403, 1.442695
    %v407 = vpow.pop %v406
    %v408 = vsel %vm282, %v405, 0.0
    %409 = vadd.xlane.f32.xlu0 %v408
    %v410 = vpop.xlane.xlu0 %409
    %v411 = vsel %vm282, %v407, 0.0
    %412 = vadd.xlane.f32.xlu0 %v411
    %v413 = vpop.xlane.xlu0 %412
    %v414 = vrcp.pop %v410
    %v415 = vrcp.pop %v413
    %v416 = vmul.f32 %v405, %v414
    %v417 = vmul.f32 %v407, %v415
    %v418 = vpack.c.bf16 %v416, %v416
    %v419 = vpack.c.bf16 %v417, %v417
    %v421 = vunpack.c.l.b16 %v221
    %v422 = vpack.c.b16 %v421, %v421
    %423 = vrot.lane.b32.xlu0 %v422, 112
    %v424 = vpop.permute.xlu0 %423
    %v426 = vsel %vm282, %v418, 0
    %v429 = vsel %vm310, %v424, 0
    %431 = vmatpush.bf16.msra.mxu0 0
    %432 = vmatpush.bf16.msra.mxu0 0
    %433 = vmatpush.bf16.msra.mxu0 0
    %434 = vmatpush.bf16.msra.mxu0 0
    %435 = vmatpush.bf16.msra.mxu0 0
    %436 = vmatpush.bf16.msra.mxu0 0
    %437 = vmatpush.bf16.msra.mxu0 0
    %438 = vmatpush.bf16.msra.mxu0 %v429
    %439 = vmatmul.bf16.gmra.mxu0 %v426
    %v440 = vpop.f32.mrf.mxu0
    %v441 = vadd.f32 0.0, %v440
    %v442 = vpop.f32.mrf.mxu0
    %443 = vdwg.mxu0
    %v445 = vunpack.c.l.b16 %v222
    %v446 = vpack.c.b16 %v445, %v445
    %447 = vrot.lane.b32.xlu0 %v446, 112
    %v448 = vpop.permute.xlu0 %447
    %v450 = vsel %vm282, %v419, 0
    %v453 = vsel %vm310, %v448, 0
    %455 = vmatpush.bf16.msra.mxu0 0
    %456 = vmatpush.bf16.msra.mxu0 0
    %457 = vmatpush.bf16.msra.mxu0 0
    %458 = vmatpush.bf16.msra.mxu0 0
    %459 = vmatpush.bf16.msra.mxu0 0
    %460 = vmatpush.bf16.msra.mxu0 0
    %461 = vmatpush.bf16.msra.mxu0 0
    %462 = vmatpush.bf16.msra.mxu0 %v453
    %463 = vmatmul.bf16.gmra.mxu0 %v450
    %v464 = vpop.f32.mrf.mxu0
    %v465 = vadd.f32 0.0, %v464
    %v466 = vpop.f32.mrf.mxu0
    %467 = vdwg.mxu0
    %468 = vrot.lane.b32.xlu0 %v225, 96
    %v469 = vpop.permute.xlu0 %468
    %470 = vrot.lane.b32.xlu0 %v225, 32
    %v471 = vpop.permute.xlu0 %470
    %v473 = vsel %vm228, %v469, 0
    %v476 = vsel %vm228, %v471, 0
    %478 = vmatpush.bf16.xpose.msra.mxu0 0
    %479 = vmatpush.bf16.xpose.msra.mxu0 0
    %480 = vmatpush.bf16.xpose.msra.mxu0 0
    %481 = vmatpush.bf16.xpose.msra.mxu0 0
    %482 = vmatpush.bf16.xpose.msra.mxu0 0
    %483 = vmatpush.bf16.xpose.msra.mxu0 0
    %484 = vmatpush.bf16.xpose.msra.mxu0 0
    %485 = vmatpush.bf16.xpose.msra.mxu0 %v476
    %486 = vmatmul.bf16.gmra.mxu0 %v473
    %v487 = vpop.f32.mrf.mxu0
    %v488 = vadd.f32 0.0, %v487
    %v489 = vpop.f32.mrf.mxu0
    %490 = vdwg.mxu0
    %491 = vrot.lane.b32.xlu0 %v250, 96
    %v492 = vpop.permute.xlu0 %491
    %493 = vrot.lane.b32.xlu0 %v250, 32
    %v494 = vpop.permute.xlu0 %493
    %v496 = vsel %vm228, %v492, 0
    %v499 = vsel %vm228, %v494, 0
    %501 = vmatpush.bf16.xpose.msra.mxu0 0
    %502 = vmatpush.bf16.xpose.msra.mxu0 0
    %503 = vmatpush.bf16.xpose.msra.mxu0 0
    %504 = vmatpush.bf16.xpose.msra.mxu0 0
    %505 = vmatpush.bf16.xpose.msra.mxu0 0
    %506 = vmatpush.bf16.xpose.msra.mxu0 0
    %507 = vmatpush.bf16.xpose.msra.mxu0 0
    %508 = vmatpush.bf16.xpose.msra.mxu0 %v499
    %509 = vmatmul.bf16.gmra.mxu0 %v496
    %v510 = vpop.f32.mrf.mxu0
    %v511 = vadd.f32 0.0, %v510
    %v512 = vpop.f32.mrf.mxu0
    %513 = vdwg.mxu0
    %v514 = vmul.f32 %v488, 0.25
    %v515 = vmul.f32 %v511, 0.25
    %v516 = vadd.f32 %v514, %v276
    %v517 = vadd.f32 %v515, %v277
    %v518 = vsel %vm282, %v516, -inf
    %519 = vmax.xlane.f32.xlu0 %v518
    %v520 = vpop.xlane.xlu0 %519
    %v521 = vsel %vm282, %v517, -inf
    %522 = vmax.xlane.f32.xlu0 %v521
    %v523 = vpop.xlane.xlu0 %522
    %v524 = vsub.f32 %v516, %v520
    %v525 = vsub.f32 %v517, %v523
    %v526 = vmul.f32 %v524, 1.442695
    %v527 = vpow.pop %v526
    %v528 = vmul.f32 %v525, 1.442695
    %v529 = vpow.pop %v528
    %v530 = vsel %vm282, %v527, 0.0
    %531 = vadd.xlane.f32.xlu0 %v530
    %v532 = vpop.xlane.xlu0 %531
    %v533 = vsel %vm282, %v529, 0.0
    %534 = vadd.xlane.f32.xlu0 %v533
    %v535 = vpop.xlane.xlu0 %534
    %v536 = vrcp.pop %v532
    %v537 = vrcp.pop %v535
    %v538 = vmul.f32 %v527, %v536
    %v539 = vmul.f32 %v529, %v537
    %v540 = vpack.c.bf16 %v538, %v538
    %v541 = vpack.c.bf16 %v539, %v539
    %542 = vrot.lane.b32.xlu0 %v422, 96
    %v543 = vpop.permute.xlu0 %542
    %v545 = vsel %vm282, %v540, 0
    %v548 = vsel %vm310, %v543, 0
    %550 = vmatpush.bf16.msra.mxu0 0
    %551 = vmatpush.bf16.msra.mxu0 0
    %552 = vmatpush.bf16.msra.mxu0 0
    %553 = vmatpush.bf16.msra.mxu0 0
    %554 = vmatpush.bf16.msra.mxu0 0
    %555 = vmatpush.bf16.msra.mxu0 0
    %556 = vmatpush.bf16.msra.mxu0 0
    %557 = vmatpush.bf16.msra.mxu0 %v548
    %558 = vmatmul.bf16.gmra.mxu0 %v545
    %v559 = vpop.f32.mrf.mxu0
    %v560 = vadd.f32 0.0, %v559
    %v561 = vpop.f32.mrf.mxu0
    %562 = vdwg.mxu0
    %563 = vrot.lane.b32.xlu0 %v446, 96
    %v564 = vpop.permute.xlu0 %563
    %v566 = vsel %vm282, %v541, 0
    %v569 = vsel %vm310, %v564, 0
    %571 = vmatpush.bf16.msra.mxu0 0
    %572 = vmatpush.bf16.msra.mxu0 0
    %573 = vmatpush.bf16.msra.mxu0 0
    %574 = vmatpush.bf16.msra.mxu0 0
    %575 = vmatpush.bf16.msra.mxu0 0
    %576 = vmatpush.bf16.msra.mxu0 0
    %577 = vmatpush.bf16.msra.mxu0 0
    %578 = vmatpush.bf16.msra.mxu0 %v569
    %579 = vmatmul.bf16.gmra.mxu0 %v566
    %v580 = vpop.f32.mrf.mxu0
    %v581 = vadd.f32 0.0, %v580
    %v582 = vpop.f32.mrf.mxu0
    %583 = vdwg.mxu0
    %584 = vrot.lane.b32.xlu0 %v225, 80
    %v585 = vpop.permute.xlu0 %584
    %586 = vrot.lane.b32.xlu0 %v225, 16
    %v587 = vpop.permute.xlu0 %586
    %v589 = vsel %vm228, %v585, 0
    %v592 = vsel %vm228, %v587, 0
    %594 = vmatpush.bf16.xpose.msra.mxu0 0
    %595 = vmatpush.bf16.xpose.msra.mxu0 0
    %596 = vmatpush.bf16.xpose.msra.mxu0 0
    %597 = vmatpush.bf16.xpose.msra.mxu0 0
    %598 = vmatpush.bf16.xpose.msra.mxu0 0
    %599 = vmatpush.bf16.xpose.msra.mxu0 0
    %600 = vmatpush.bf16.xpose.msra.mxu0 0
    %601 = vmatpush.bf16.xpose.msra.mxu0 %v592
    %602 = vmatmul.bf16.gmra.mxu0 %v589
    %v603 = vpop.f32.mrf.mxu0
    %v604 = vadd.f32 0.0, %v603
    %v605 = vpop.f32.mrf.mxu0
    %606 = vdwg.mxu0
    %607 = vrot.lane.b32.xlu0 %v250, 80
    %v608 = vpop.permute.xlu0 %607
    %609 = vrot.lane.b32.xlu0 %v250, 16
    %v610 = vpop.permute.xlu0 %609
    %v612 = vsel %vm228, %v608, 0
    %v615 = vsel %vm228, %v610, 0
    %617 = vmatpush.bf16.xpose.msra.mxu0 0
    %618 = vmatpush.bf16.xpose.msra.mxu0 0
    %619 = vmatpush.bf16.xpose.msra.mxu0 0
    %620 = vmatpush.bf16.xpose.msra.mxu0 0
    %621 = vmatpush.bf16.xpose.msra.mxu0 0
    %622 = vmatpush.bf16.xpose.msra.mxu0 0
    %623 = vmatpush.bf16.xpose.msra.mxu0 0
    %624 = vmatpush.bf16.xpose.msra.mxu0 %v615
    %625 = vmatmul.bf16.gmra.mxu0 %v612
    %v626 = vpop.f32.mrf.mxu0
    %v627 = vadd.f32 0.0, %v626
    %v628 = vpop.f32.mrf.mxu0
    %629 = vdwg.mxu0
    %v630 = vmul.f32 %v604, 0.25
    %v631 = vmul.f32 %v627, 0.25
    %v632 = vadd.f32 %v630, %v276
    %v633 = vadd.f32 %v631, %v277
    %v634 = vsel %vm282, %v632, -inf
    %635 = vmax.xlane.f32.xlu0 %v634
    %v636 = vpop.xlane.xlu0 %635
    %v637 = vsel %vm282, %v633, -inf
    %638 = vmax.xlane.f32.xlu0 %v637
    %v639 = vpop.xlane.xlu0 %638
    %v640 = vsub.f32 %v632, %v636
    %v641 = vsub.f32 %v633, %v639
    %v642 = vmul.f32 %v640, 1.442695
    %v643 = vpow.pop %v642
    %v644 = vmul.f32 %v641, 1.442695
    %v645 = vpow.pop %v644
    %v646 = vsel %vm282, %v643, 0.0
    %647 = vadd.xlane.f32.xlu0 %v646
    %v648 = vpop.xlane.xlu0 %647
    %v649 = vsel %vm282, %v645, 0.0
    %650 = vadd.xlane.f32.xlu0 %v649
    %v651 = vpop.xlane.xlu0 %650
    %v652 = vrcp.pop %v648
    %v653 = vrcp.pop %v651
    %v654 = vmul.f32 %v643, %v652
    %v655 = vmul.f32 %v645, %v653
    %v656 = vpack.c.bf16 %v654, %v654
    %v657 = vpack.c.bf16 %v655, %v655
    %658 = vrot.lane.b32.xlu0 %v422, 80
    %v659 = vpop.permute.xlu0 %658
    %v661 = vsel %vm282, %v656, 0
    %v664 = vsel %vm310, %v659, 0
    %666 = vmatpush.bf16.msra.mxu0 0
    %667 = vmatpush.bf16.msra.mxu0 0
    %668 = vmatpush.bf16.msra.mxu0 0
    %669 = vmatpush.bf16.msra.mxu0 0
    %670 = vmatpush.bf16.msra.mxu0 0
    %671 = vmatpush.bf16.msra.mxu0 0
    %672 = vmatpush.bf16.msra.mxu0 0
    %673 = vmatpush.bf16.msra.mxu0 %v664
    %674 = vmatmul.bf16.gmra.mxu0 %v661
    %v675 = vpop.f32.mrf.mxu0
    %v676 = vadd.f32 0.0, %v675
    %v677 = vpop.f32.mrf.mxu0
    %678 = vdwg.mxu0
    %679 = vrot.lane.b32.xlu0 %v446, 80
    %v680 = vpop.permute.xlu0 %679
    %v682 = vsel %vm282, %v657, 0
    %v685 = vsel %vm310, %v680, 0
    %687 = vmatpush.bf16.msra.mxu0 0
    %688 = vmatpush.bf16.msra.mxu0 0
    %689 = vmatpush.bf16.msra.mxu0 0
    %690 = vmatpush.bf16.msra.mxu0 0
    %691 = vmatpush.bf16.msra.mxu0 0
    %692 = vmatpush.bf16.msra.mxu0 0
    %693 = vmatpush.bf16.msra.mxu0 0
    %694 = vmatpush.bf16.msra.mxu0 %v685
    %695 = vmatmul.bf16.gmra.mxu0 %v682
    %v696 = vpop.f32.mrf.mxu0
    %v697 = vadd.f32 0.0, %v696
    %v698 = vpop.f32.mrf.mxu0
    %699 = vdwg.mxu0
    %702 = vrot.lane.b32.xlu0 %v441, 16
    %v703 = vpop.permute.xlu0 %702
    %704 = vrot.lane.b32.xlu0 %v465, 16
    %v705 = vpop.permute.xlu0 %704
    %710 = vrot.lane.b32.xlu0 %v560, 32
    %v711 = vpop.permute.xlu0 %710
    %712 = vrot.lane.b32.xlu0 %v581, 32
    %v713 = vpop.permute.xlu0 %712
    %718 = vrot.lane.b32.xlu0 %v676, 48
    %v719 = vpop.permute.xlu0 %718
    %720 = vrot.lane.b32.xlu0 %v697, 48
    %v721 = vpop.permute.xlu0 %720
    %v724 = vsel %vm228, %v324, %v703
    %v725 = vsel %vm228, %v343, %v705
    %vm726 = vcmask 261120
    %v727 = vsel %vm726, %v724, %v711
    %v728 = vsel %vm726, %v725, %v713
    %vm729 = vcmask 392192
    %v730 = vsel %vm729, %v727, %v719
    %v731 = vsel %vm729, %v728, %v721
    %v732 = vpack.c.bf16 %v731, %v730
    %v733 = vld [vmem:[%s6] sm:$0xf]
    %v734 = vld [vmem:[%s6 + $0x4] sm:$0xf]
    %v735 = vld [vmem:[%s6 + $0x8] sm:$0xf]
    %v736 = vld [vmem:[%s6 + $0xc] sm:$0xf]
    %v737 = vld [vmem:[%s6 + $0x10] sm:$0xf]
    %v738 = vld [vmem:[%s6 + $0x14] sm:$0xf]
    %v739 = vld [vmem:[%s6 + $0x18] sm:$0xf]
    %v740 = vld [vmem:[%s6 + $0x1c] sm:$0xf]
    %v741 = vld [vmem:[%s7] sm:$0x1]
    %v743 = vperm.slane %v741, 0
    %v753 = vunpack.c.l.b16 %v733
    %v754 = vunpack.c.l.b16 %v734
    %v755 = vunpack.c.l.b16 %v735
    %v756 = vunpack.c.l.b16 %v736
    %v757 = vunpack.c.l.b16 %v737
    %v758 = vunpack.c.l.b16 %v738
    %v759 = vunpack.c.l.b16 %v739
    %v760 = vunpack.c.l.b16 %v740
    %v761 = vpack.c.b16 %v754, %v753
    %v762 = vpack.c.b16 %v756, %v755
    %v763 = vpack.c.b16 %v758, %v757
    %v764 = vpack.c.b16 %v760, %v759
    %v770 = vsel %vm71, %v732, 0
    %772 = vmatpush.bf16.msra.mxu0 0
    %773 = vmatpush.bf16.msra.mxu0 0
    %774 = vmatpush.bf16.msra.mxu0 0
    %775 = vmatpush.bf16.msra.mxu0 0
    %776 = vmatpush.bf16.msra.mxu0 %v764
    %777 = vmatpush.bf16.msra.mxu0 %v763
    %778 = vmatpush.bf16.msra.mxu0 %v762
    %779 = vmatpush.bf16.msra.mxu0 %v761
    %780 = vmatmul.bf16.gmra.mxu0 %v770
    %v781 = vpop.f32.mrf.mxu0
    %v782 = vadd.f32 %v743, %v781
    %v783 = vpop.f32.mrf.mxu0
    %v784 = vadd.f32 %v743, %v783
    %785 = vdwg.mxu0
    %v786 = vadd.f32 %v131, %v782
    %v787 = vadd.f32 %v132, %v784
    %v788 = vld [vmem:[%s8] sm:$0x1]
    %v789 = vld [vmem:[%s9] sm:$0x1]
    %v790 = vsel %vm71, %v786, 0.0
    %791 = vadd.xlane.f32.xlu0 %v790
    %v792 = vpop.xlane.xlu0 %791
    %v793 = vsel %vm71, %v787, 0.0
    %794 = vadd.xlane.f32.xlu0 %v793
    %v795 = vpop.xlane.xlu0 %794
    %v796 = vmul.f32 %v792, %v84
    %v797 = vmul.f32 %v795, %v84
    %v798 = vsub.f32 %v786, %v796
    %v799 = vsub.f32 %v787, %v797
    %v800 = vmul.f32 %v798, %v798
    %v801 = vmul.f32 %v799, %v799
    %v802 = vsel %vm71, %v800, 0.0
    %803 = vadd.xlane.f32.xlu0 %v802
    %v804 = vpop.xlane.xlu0 %803
    %v805 = vsel %vm71, %v801, 0.0
    %806 = vadd.xlane.f32.xlu0 %v805
    %v807 = vpop.xlane.xlu0 %806
    %v808 = vmul.f32 %v804, %v84
    %v809 = vmul.f32 %v807, %v84
    %v810 = vadd.f32 %v808, 1e-05
    %v811 = vadd.f32 %v809, 1e-05
    %v812 = vrsqrt.pop %v810
    %v813 = vmul.f32 %v812, %v810
    %v814 = vmul.f32 %v813, %v812
    %v815 = vmul.f32 0.5, %v814
    %v816 = vsub.f32 1.5, %v815
    %v817 = vmul.f32 %v812, %v816
    %vm818 = vweird.f32 %v810
    %vm819 = vweird.f32 %v812
    %vm820 = vmor %vm818, %vm819
    %v821 = vsel %vm820, %v812, %v817
    %v822 = vrsqrt.pop %v811
    %v823 = vmul.f32 %v822, %v811
    %v824 = vmul.f32 %v823, %v822
    %v825 = vmul.f32 0.5, %v824
    %v826 = vsub.f32 1.5, %v825
    %v827 = vmul.f32 %v822, %v826
    %vm828 = vweird.f32 %v811
    %vm829 = vweird.f32 %v822
    %vm830 = vmor %vm828, %vm829
    %v831 = vsel %vm830, %v822, %v827
    %v832 = vmul.f32 %v798, %v821
    %v833 = vmul.f32 %v799, %v831
    %v835 = vperm.slane %v788, 0
    %v837 = vmul.f32 %v832, %v835
    %v838 = vmul.f32 %v833, %v835
    %v840 = vperm.slane %v789, 0
    %v842 = vadd.f32 %v837, %v840
    %v843 = vadd.f32 %v838, %v840
    %v844 = vpack.c.bf16 %v843, %v842
    %v845 = vld [vmem:[%s10] sm:$0xf]
    %v846 = vld [vmem:[%s10 + $0x4] sm:$0xf]
    %v847 = vld [vmem:[%s10 + $0x8] sm:$0xf]
    %v848 = vld [vmem:[%s10 + $0xc] sm:$0xf]
    %v849 = vld [vmem:[%s10 + $0x10] sm:$0xf]
    %v850 = vld [vmem:[%s10 + $0x14] sm:$0xf]
    %v851 = vld [vmem:[%s10 + $0x18] sm:$0xf]
    %v852 = vld [vmem:[%s10 + $0x1c] sm:$0xf]
    %v853 = vld [vmem:[%s11] sm:$0x1]
    %v855 = vperm.slane %v853, 0
    %v865 = vunpack.c.l.b16 %v845
    %v866 = vunpack.c.l.b16 %v846
    %v867 = vunpack.c.l.b16 %v847
    %v868 = vunpack.c.l.b16 %v848
    %v869 = vunpack.c.l.b16 %v849
    %v870 = vunpack.c.l.b16 %v850
    %v871 = vunpack.c.l.b16 %v851
    %v872 = vunpack.c.l.b16 %v852
    %v873 = vpack.c.b16 %v866, %v865
    %v874 = vpack.c.b16 %v868, %v867
    %v875 = vpack.c.b16 %v870, %v869
    %v876 = vpack.c.b16 %v872, %v871
    %v882 = vsel %vm71, %v844, 0
    %884 = vmatpush.bf16.msra.mxu0 0
    %885 = vmatpush.bf16.msra.mxu0 0
    %886 = vmatpush.bf16.msra.mxu0 0
    %887 = vmatpush.bf16.msra.mxu0 0
    %888 = vmatpush.bf16.msra.mxu0 %v876
    %889 = vmatpush.bf16.msra.mxu0 %v875
    %890 = vmatpush.bf16.msra.mxu0 %v874
    %891 = vmatpush.bf16.msra.mxu0 %v873
    %892 = vmatmul.bf16.gmra.mxu0 %v882
    %v893 = vpop.f32.mrf.mxu0
    %v894 = vadd.f32 %v855, %v893
    %v895 = vpop.f32.mrf.mxu0
    %v896 = vadd.f32 %v855, %v895
    %897 = vdwg.mxu0
    %v898 = vmul.f32 %v894, %v894
    %v899 = vmul.f32 %v896, %v896
    %v900 = vmul.f32 %v894, %v898
    %v901 = vmul.f32 %v896, %v899
    %v902 = vmul.f32 %v900, 0.044715
    %v903 = vmul.f32 %v901, 0.044715
    %v904 = vadd.f32 %v894, %v902
    %v905 = vadd.f32 %v896, %v903
    %v906 = vmul.f32 %v904, 0.7978846
    %v907 = vmul.f32 %v905, 0.7978846
    %v908 = vtanh.pop %v906
    %v909 = vtanh.pop %v907
    %v910 = vadd.f32 %v908, 1.0
    %v911 = vadd.f32 %v909, 1.0
    %v912 = vmul.f32 %v910, 0.5
    %v913 = vmul.f32 %v911, 0.5
    %v914 = vmul.f32 %v894, %v912
    %v915 = vmul.f32 %v896, %v913
    %v916 = vpack.c.bf16 %v915, %v914
    %v917 = vld [vmem:[%s12] sm:$0xf]
    %v918 = vld [vmem:[%s12 + $0x4] sm:$0xf]
    %v919 = vld [vmem:[%s12 + $0x8] sm:$0xf]
    %v920 = vld [vmem:[%s12 + $0xc] sm:$0xf]
    %v921 = vld [vmem:[%s12 + $0x10] sm:$0xf]
    %v922 = vld [vmem:[%s12 + $0x14] sm:$0xf]
    %v923 = vld [vmem:[%s12 + $0x18] sm:$0xf]
    %v924 = vld [vmem:[%s12 + $0x1c] sm:$0xf]
    %v925 = vld [vmem:[%s12 + $0x20] sm:$0xf]
    %v926 = vld [vmem:[%s12 + $0x24] sm:$0xf]
    %v927 = vld [vmem:[%s12 + $0x28] sm:$0xf]
    %v928 = vld [vmem:[%s12 + $0x2c] sm:$0xf]
    %v929 = vld [vmem:[%s12 + $0x30] sm:$0xf]
    %v930 = vld [vmem:[%s12 + $0x34] sm:$0xf]
    %v931 = vld [vmem:[%s12 + $0x38] sm:$0xf]
    %v932 = vld [vmem:[%s12 + $0x3c] sm:$0xf]
    %v933 = vld [vmem:[%s13] sm:$0x1]
    %v935 = vperm.slane %v933, 0
    %v953 = vunpack.c.l.b16 %v917
    %v954 = vunpack.c.l.b16 %v918
    %v955 = vunpack.c.l.b16 %v919
    %v956 = vunpack.c.l.b16 %v920
    %v957 = vunpack.c.l.b16 %v921
    %v958 = vunpack.c.l.b16 %v922
    %v959 = vunpack.c.l.b16 %v923
    %v960 = vunpack.c.l.b16 %v924
    %v961 = vunpack.c.l.b16 %v925
    %v962 = vunpack.c.l.b16 %v926
    %v963 = vunpack.c.l.b16 %v927
    %v964 = vunpack.c.l.b16 %v928
    %v965 = vunpack.c.l.b16 %v929
    %v966 = vunpack.c.l.b16 %v930
    %v967 = vunpack.c.l.b16 %v931
    %v968 = vunpack.c.l.b16 %v932
    %v969 = vpack.c.b16 %v954, %v953
    %v970 = vpack.c.b16 %v956, %v955
    %v971 = vpack.c.b16 %v958, %v957
    %v972 = vpack.c.b16 %v960, %v959
    %v973 = vpack.c.b16 %v962, %v961
    %v974 = vpack.c.b16 %v964, %v963
    %v975 = vpack.c.b16 %v966, %v965
    %v976 = vpack.c.b16 %v968, %v967
    %985 = vmatpush.bf16.msra.mxu0 %v976
    %986 = vmatpush.bf16.msra.mxu0 %v975
    %987 = vmatpush.bf16.msra.mxu0 %v974
    %988 = vmatpush.bf16.msra.mxu0 %v973
    %989 = vmatpush.bf16.msra.mxu0 %v972
    %990 = vmatpush.bf16.msra.mxu0 %v971
    %991 = vmatpush.bf16.msra.mxu0 %v970
    %992 = vmatpush.bf16.msra.mxu0 %v969
    %993 = vmatmul.bf16.gmra.mxu0 %v916
    %v994 = vpop.f32.mrf.mxu0
    %v995 = vadd.f32 %v935, %v994
    %v996 = vpop.f32.mrf.mxu0
    %v997 = vadd.f32 %v935, %v996
    %998 = vdwg.mxu0
    %v999 = vadd.f32 %v842, %v995
    %v1000 = vadd.f32 %v843, %v997
    %v1001 = vld [vmem:[%s14] sm:$0x1]
    %v1002 = vld [vmem:[%s15] sm:$0x1]
    %v1003 = vsel %vm71, %v999, 0.0
    %1004 = vadd.xlane.f32.xlu0 %v1003
    %v1005 = vpop.xlane.xlu0 %1004
    %v1006 = vsel %vm71, %v1000, 0.0
    %1007 = vadd.xlane.f32.xlu0 %v1006
    %v1008 = vpop.xlane.xlu0 %1007
    %v1009 = vmul.f32 %v1005, %v84
    %v1010 = vmul.f32 %v1008, %v84
    %v1011 = vsub.f32 %v999, %v1009
    %v1012 = vsub.f32 %v1000, %v1010
    %v1013 = vmul.f32 %v1011, %v1011
    %v1014 = vmul.f32 %v1012, %v1012
    %v1015 = vsel %vm71, %v1013, 0.0
    %1016 = vadd.xlane.f32.xlu0 %v1015
    %v1017 = vpop.xlane.xlu0 %1016
    %v1018 = vsel %vm71, %v1014, 0.0
    %1019 = vadd.xlane.f32.xlu0 %v1018
    %v1020 = vpop.xlane.xlu0 %1019
    %v1021 = vmul.f32 %v1017, %v84
    %v1022 = vmul.f32 %v1020, %v84
    %v1023 = vadd.f32 %v1021, 1e-05
    %v1024 = vadd.f32 %v1022, 1e-05
    %v1025 = vrsqrt.pop %v1023
    %v1026 = vmul.f32 %v1025, %v1023
    %v1027 = vmul.f32 %v1026, %v1025
    %v1028 = vmul.f32 0.5, %v1027
    %v1029 = vsub.f32 1.5, %v1028
    %v1030 = vmul.f32 %v1025, %v1029
    %vm1031 = vweird.f32 %v1023
    %vm1032 = vweird.f32 %v1025
    %vm1033 = vmor %vm1031, %vm1032
    %v1034 = vsel %vm1033, %v1025, %v1030
    %v1035 = vrsqrt.pop %v1024
    %v1036 = vmul.f32 %v1035, %v1024
    %v1037 = vmul.f32 %v1036, %v1035
    %v1038 = vmul.f32 0.5, %v1037
    %v1039 = vsub.f32 1.5, %v1038
    %v1040 = vmul.f32 %v1035, %v1039
    %vm1041 = vweird.f32 %v1024
    %vm1042 = vweird.f32 %v1035
    %vm1043 = vmor %vm1041, %vm1042
    %v1044 = vsel %vm1043, %v1035, %v1040
    %v1045 = vmul.f32 %v1011, %v1034
    %v1046 = vmul.f32 %v1012, %v1044
    %v1048 = vperm.slane %v1001, 0
    %v1050 = vmul.f32 %v1045, %v1048
    %v1051 = vmul.f32 %v1046, %v1048
    %v1053 = vperm.slane %v1002, 0
    %v1055 = vadd.f32 %v1050, %v1053
    %v1056 = vadd.f32 %v1051, %v1053
    %v1057 = vpack.c.bf16 %v1056, %v1055
    %s1058 = scalar_lea.vmem %s4, 64
    %v1059 = vld [vmem:[%s1058] sm:$0xff]
    %v1060 = vld [vmem:[%s1058 + $0x8] sm:$0xff]
    %v1061 = vld [vmem:[%s1058 + $0x10] sm:$0xff]
    %v1062 = vld [vmem:[%s1058 + $0x18] sm:$0xff]
    %v1063 = vld [vmem:[%s1058 + $0x20] sm:$0xff]
    %v1064 = vld [vmem:[%s1058 + $0x28] sm:$0xff]
    %v1065 = vld [vmem:[%s1058 + $0x30] sm:$0xff]
    %v1066 = vld [vmem:[%s1058 + $0x38] sm:$0xff]
    %s1067 = scalar_lea.vmem %s5, 2
    %v1068 = vld [vmem:[%s1067] sm:$0x3]
    %v1070 = vperm.slane %v1068, 0
    %v1071 = vperm.slane %v1068, 1
    %v1082 = vunpack.c.l.b16 %v1059
    %v1083 = vunpack.c.h.b16 %v1059
    %v1084 = vunpack.c.l.b16 %v1060
    %v1085 = vunpack.c.h.b16 %v1060
    %v1086 = vunpack.c.l.b16 %v1061
    %v1087 = vunpack.c.h.b16 %v1061
    %v1088 = vunpack.c.l.b16 %v1062
    %v1089 = vunpack.c.h.b16 %v1062
    %v1090 = vunpack.c.l.b16 %v1063
    %v1091 = vunpack.c.h.b16 %v1063
    %v1092 = vunpack.c.l.b16 %v1064
    %v1093 = vunpack.c.h.b16 %v1064
    %v1094 = vunpack.c.l.b16 %v1065
    %v1095 = vunpack.c.h.b16 %v1065
    %v1096 = vunpack.c.l.b16 %v1066
    %v1097 = vunpack.c.h.b16 %v1066
    %v1098 = vpack.c.b16 %v1084, %v1082
    %v1099 = vpack.c.b16 %v1085, %v1083
    %v1100 = vpack.c.b16 %v1088, %v1086
    %v1101 = vpack.c.b16 %v1089, %v1087
    %v1102 = vpack.c.b16 %v1092, %v1090
    %v1103 = vpack.c.b16 %v1093, %v1091
    %v1104 = vpack.c.b16 %v1096, %v1094
    %v1105 = vpack.c.b16 %v1097, %v1095
    %v1115 = vsel %vm71, %v1057, 0
    %1117 = vmatpush.bf16.msra.mxu0 0
    %1118 = vmatpush.bf16.msra.mxu0 0
    %1119 = vmatpush.bf16.msra.mxu0 0
    %1120 = vmatpush.bf16.msra.mxu0 0
    %1121 = vmatpush.bf16.msra.mxu0 %v1104
    %1122 = vmatpush.bf16.msra.mxu0 %v1102
    %1123 = vmatpush.bf16.msra.mxu0 %v1100
    %1124 = vmatpush.bf16.msra.mxu0 %v1098
    %1125 = vmatmul.bf16.gmra.mxu0 %v1115
    %v1126 = vpop.f32.mrf.mxu0
    %v1127 = vadd.f32 %v1070, %v1126
    %v1128 = vpop.f32.mrf.mxu0
    %v1129 = vadd.f32 %v1070, %v1128
    %1130 = vdwg.mxu0
    %1131 = vmatpush.bf16.msra.mxu0 0
    %1132 = vmatpush.bf16.msra.mxu0 0
    %1133 = vmatpush.bf16.msra.mxu0 0
    %1134 = vmatpush.bf16.msra.mxu0 0
    %1135 = vmatpush.bf16.msra.mxu0 %v1105
    %1136 = vmatpush.bf16.msra.mxu0 %v1103
    %1137 = vmatpush.bf16.msra.mxu0 %v1101
    %1138 = vmatpush.bf16.msra.mxu0 %v1099
    %1139 = vmatmul.bf16.gmra.mxu0 %v1115
    %v1140 = vpop.f32.mrf.mxu0
    %v1141 = vadd.f32 %v1071, %v1140
    %v1142 = vpop.f32.mrf.mxu0
    %v1143 = vadd.f32 %v1071, %v1142
    %1144 = vdwg.mxu0
    %v1145 = vpack.c.bf16 %v1127, %v1127
    %v1146 = vpack.c.bf16 %v1129, %v1129
    %v1147 = vpack.c.bf16 %v1141, %v1141
    %v1148 = vpack.c.bf16 %v1143, %v1143
    %v1150 = vunpack.c.l.b16 %v1145
    %v1151 = vpack.c.b16 %v1150, %v1150
    %1152 = vrot.lane.b32.xlu0 %v1151, 64
    %v1153 = vpop.permute.xlu0 %1152
    %v1155 = vsel %vm228, %v1145, 0
    %v1158 = vsel %vm228, %v1153, 0
    %1160 = vmatpush.bf16.xpose.msra.mxu0 0
    %1161 = vmatpush.bf16.xpose.msra.mxu0 0
    %1162 = vmatpush.bf16.xpose.msra.mxu0 0
    %1163 = vmatpush.bf16.xpose.msra.mxu0 0
    %1164 = vmatpush.bf16.xpose.msra.mxu0 0
    %1165 = vmatpush.bf16.xpose.msra.mxu0 0
    %1166 = vmatpush.bf16.xpose.msra.mxu0 0
    %1167 = vmatpush.bf16.xpose.msra.mxu0 %v1158
    %1168 = vmatmul.bf16.gmra.mxu0 %v1155
    %v1169 = vpop.f32.mrf.mxu0
    %v1170 = vadd.f32 0.0, %v1169
    %v1171 = vpop.f32.mrf.mxu0
    %1172 = vdwg.mxu0
    %v1174 = vunpack.c.l.b16 %v1146
    %v1175 = vpack.c.b16 %v1174, %v1174
    %1176 = vrot.lane.b32.xlu0 %v1175, 64
    %v1177 = vpop.permute.xlu0 %1176
    %v1179 = vsel %vm228, %v1146, 0
    %v1182 = vsel %vm228, %v1177, 0
    %1184 = vmatpush.bf16.xpose.msra.mxu0 0
    %1185 = vmatpush.bf16.xpose.msra.mxu0 0
    %1186 = vmatpush.bf16.xpose.msra.mxu0 0
    %1187 = vmatpush.bf16.xpose.msra.mxu0 0
    %1188 = vmatpush.bf16.xpose.msra.mxu0 0
    %1189 = vmatpush.bf16.xpose.msra.mxu0 0
    %1190 = vmatpush.bf16.xpose.msra.mxu0 0
    %1191 = vmatpush.bf16.xpose.msra.mxu0 %v1182
    %1192 = vmatmul.bf16.gmra.mxu0 %v1179
    %v1193 = vpop.f32.mrf.mxu0
    %v1194 = vadd.f32 0.0, %v1193
    %v1195 = vpop.f32.mrf.mxu0
    %1196 = vdwg.mxu0
    %v1197 = vmul.f32 %v1170, 0.25
    %v1198 = vmul.f32 %v1194, 0.25
    %v1199 = vadd.f32 %v1197, %v276
    %v1200 = vadd.f32 %v1198, %v277
    %v1201 = vsel %vm282, %v1199, -inf
    %1202 = vmax.xlane.f32.xlu0 %v1201
    %v1203 = vpop.xlane.xlu0 %1202
    %v1204 = vsel %vm282, %v1200, -inf
    %1205 = vmax.xlane.f32.xlu0 %v1204
    %v1206 = vpop.xlane.xlu0 %1205
    %v1207 = vsub.f32 %v1199, %v1203
    %v1208 = vsub.f32 %v1200, %v1206
    %v1209 = vmul.f32 %v1207, 1.442695
    %v1210 = vpow.pop %v1209
    %v1211 = vmul.f32 %v1208, 1.442695
    %v1212 = vpow.pop %v1211
    %v1213 = vsel %vm282, %v1210, 0.0
    %1214 = vadd.xlane.f32.xlu0 %v1213
    %v1215 = vpop.xlane.xlu0 %1214
    %v1216 = vsel %vm282, %v1212, 0.0
    %1217 = vadd.xlane.f32.xlu0 %v1216
    %v1218 = vpop.xlane.xlu0 %1217
    %v1219 = vrcp.pop %v1215
    %v1220 = vrcp.pop %v1218
    %v1221 = vmul.f32 %v1210, %v1219
    %v1222 = vmul.f32 %v1212, %v1220
    %v1223 = vpack.c.bf16 %v1221, %v1221
    %v1224 = vpack.c.bf16 %v1222, %v1222
    %v1226 = vsel %vm282, %v1223, 0
    %v1229 = vsel %vm310, %v1147, 0
    %1231 = vmatpush.bf16.msra.mxu0 0
    %1232 = vmatpush.bf16.msra.mxu0 0
    %1233 = vmatpush.bf16.msra.mxu0 0
    %1234 = vmatpush.bf16.msra.mxu0 0
    %1235 = vmatpush.bf16.msra.mxu0 0
    %1236 = vmatpush.bf16.msra.mxu0 0
    %1237 = vmatpush.bf16.msra.mxu0 0
    %1238 = vmatpush.bf16.msra.mxu0 %v1229
    %1239 = vmatmul.bf16.gmra.mxu0 %v1226
    %v1240 = vpop.f32.mrf.mxu0
    %v1241 = vadd.f32 0.0, %v1240
    %v1242 = vpop.f32.mrf.mxu0
    %1243 = vdwg.mxu0
    %v1245 = vsel %vm282, %v1224, 0
    %v1248 = vsel %vm310, %v1148, 0
    %1250 = vmatpush.bf16.msra.mxu0 0
    %1251 = vmatpush.bf16.msra.mxu0 0
    %1252 = vmatpush.bf16.msra.mxu0 0
    %1253 = vmatpush.bf16.msra.mxu0 0
    %1254 = vmatpush.bf16.msra.mxu0 0
    %1255 = vmatpush.bf16.msra.mxu0 0
    %1256 = vmatpush.bf16.msra.mxu0 0
    %1257 = vmatpush.bf16.msra.mxu0 %v1248
    %1258 = vmatmul.bf16.gmra.mxu0 %v1245
    %v1259 = vpop.f32.mrf.mxu0
    %v1260 = vadd.f32 0.0, %v1259
    %v1261 = vpop.f32.mrf.mxu0
    %1262 = vdwg.mxu0
    %1263 = vrot.lane.b32.xlu0 %v1151, 112
    %v1264 = vpop.permute.xlu0 %1263
    %1265 = vrot.lane.b32.xlu0 %v1151, 48
    %v1266 = vpop.permute.xlu0 %1265
    %v1268 = vsel %vm228, %v1264, 0
    %v1271 = vsel %vm228, %v1266, 0
    %1273 = vmatpush.bf16.xpose.msra.mxu0 0
    %1274 = vmatpush.bf16.xpose.msra.mxu0 0
    %1275 = vmatpush.bf16.xpose.msra.mxu0 0
    %1276 = vmatpush.bf16.xpose.msra.mxu0 0
    %1277 = vmatpush.bf16.xpose.msra.mxu0 0
    %1278 = vmatpush.bf16.xpose.msra.mxu0 0
    %1279 = vmatpush.bf16.xpose.msra.mxu0 0
    %1280 = vmatpush.bf16.xpose.msra.mxu0 %v1271
    %1281 = vmatmul.bf16.gmra.mxu0 %v1268
    %v1282 = vpop.f32.mrf.mxu0
    %v1283 = vadd.f32 0.0, %v1282
    %v1284 = vpop.f32.mrf.mxu0
    %1285 = vdwg.mxu0
    %1286 = vrot.lane.b32.xlu0 %v1175, 112
    %v1287 = vpop.permute.xlu0 %1286
    %1288 = vrot.lane.b32.xlu0 %v1175, 48
    %v1289 = vpop.permute.xlu0 %1288
    %v1291 = vsel %vm228, %v1287, 0
    %v1294 = vsel %vm228, %v1289, 0
    %1296 = vmatpush.bf16.xpose.msra.mxu0 0
    %1297 = vmatpush.bf16.xpose.msra.mxu0 0
    %1298 = vmatpush.bf16.xpose.msra.mxu0 0
    %1299 = vmatpush.bf16.xpose.msra.mxu0 0
    %1300 = vmatpush.bf16.xpose.msra.mxu0 0
    %1301 = vmatpush.bf16.xpose.msra.mxu0 0
    %1302 = vmatpush.bf16.xpose.msra.mxu0 0
    %1303 = vmatpush.bf16.xpose.msra.mxu0 %v1294
    %1304 = vmatmul.bf16.gmra.mxu0 %v1291
    %v1305 = vpop.f32.mrf.mxu0
    %v1306 = vadd.f32 0.0, %v1305
    %v1307 = vpop.f32.mrf.mxu0
    %1308 = vdwg.mxu0
    %v1309 = vmul.f32 %v1283, 0.25
    %v1310 = vmul.f32 %v1306, 0.25
    %v1311 = vadd.f32 %v1309, %v276
    %v1312 = vadd.f32 %v1310, %v277
    %v1313 = vsel %vm282, %v1311, -inf
    %1314 = vmax.xlane.f32.xlu0 %v1313
    %v1315 = vpop.xlane.xlu0 %1314
    %v1316 = vsel %vm282, %v1312, -inf
    %1317 = vmax.xlane.f32.xlu0 %v1316
    %v1318 = vpop.xlane.xlu0 %1317
    %v1319 = vsub.f32 %v1311, %v1315
    %v1320 = vsub.f32 %v1312, %v1318
    %v1321 = vmul.f32 %v1319, 1.442695
    %v1322 = vpow.pop %v1321
    %v1323 = vmul.f32 %v1320, 1.442695
    %v1324 = vpow.pop %v1323
    %v1325 = vsel %vm282, %v1322, 0.0
    %1326 = vadd.xlane.f32.xlu0 %v1325
    %v1327 = vpop.xlane.xlu0 %1326
    %v1328 = vsel %vm282, %v1324, 0.0
    %1329 = vadd.xlane.f32.xlu0 %v1328
    %v1330 = vpop.xlane.xlu0 %1329
    %v1331 = vrcp.pop %v1327
    %v1332 = vrcp.pop %v1330
    %v1333 = vmul.f32 %v1322, %v1331
    %v1334 = vmul.f32 %v1324, %v1332
    %v1335 = vpack.c.bf16 %v1333, %v1333
    %v1336 = vpack.c.bf16 %v1334, %v1334
    %v1338 = vunpack.c.l.b16 %v1147
    %v1339 = vpack.c.b16 %v1338, %v1338
    %1340 = vrot.lane.b32.xlu0 %v1339, 112
    %v1341 = vpop.permute.xlu0 %1340
    %v1343 = vsel %vm282, %v1335, 0
    %v1346 = vsel %vm310, %v1341, 0
    %1348 = vmatpush.bf16.msra.mxu0 0
    %1349 = vmatpush.bf16.msra.mxu0 0
    %1350 = vmatpush.bf16.msra.mxu0 0
    %1351 = vmatpush.bf16.msra.mxu0 0
    %1352 = vmatpush.bf16.msra.mxu0 0
    %1353 = vmatpush.bf16.msra.mxu0 0
    %1354 = vmatpush.bf16.msra.mxu0 0
    %1355 = vmatpush.bf16.msra.mxu0 %v1346
    %1356 = vmatmul.bf16.gmra.mxu0 %v1343
    %v1357 = vpop.f32.mrf.mxu0
    %v1358 = vadd.f32 0.0, %v1357
    %v1359 = vpop.f32.mrf.mxu0
    %1360 = vdwg.mxu0
    %v1362 = vunpack.c.l.b16 %v1148
    %v1363 = vpack.c.b16 %v1362, %v1362
    %1364 = vrot.lane.b32.xlu0 %v1363, 112
    %v1365 = vpop.permute.xlu0 %1364
    %v1367 = vsel %vm282, %v1336, 0
    %v1370 = vsel %vm310, %v1365, 0
    %1372 = vmatpush.bf16.msra.mxu0 0
    %1373 = vmatpush.bf16.msra.mxu0 0
    %1374 = vmatpush.bf16.msra.mxu0 0
    %1375 = vmatpush.bf16.msra.mxu0 0
    %1376 = vmatpush.bf16.msra.mxu0 0
    %1377 = vmatpush.bf16.msra.mxu0 0
    %1378 = vmatpush.bf16.msra.mxu0 0
    %1379 = vmatpush.bf16.msra.mxu0 %v1370
    %1380 = vmatmul.bf16.gmra.mxu0 %v1367
    %v1381 = vpop.f32.mrf.mxu0
    %v1382 = vadd.f32 0.0, %v1381
    %v1383 = vpop.f32.mrf.mxu0
    %1384 = vdwg.mxu0
    %1385 = vrot.lane.b32.xlu0 %v1151, 96
    %v1386 = vpop.permute.xlu0 %1385
    %1387 = vrot.lane.b32.xlu0 %v1151, 32
    %v1388 = vpop.permute.xlu0 %1387
    %v1390 = vsel %vm228, %v1386, 0
    %v1393 = vsel %vm228, %v1388, 0
    %1395 = vmatpush.bf16.xpose.msra.mxu0 0
    %1396 = vmatpush.bf16.xpose.msra.mxu0 0
    %1397 = vmatpush.bf16.xpose.msra.mxu0 0
    %1398 = vmatpush.bf16.xpose.msra.mxu0 0
    %1399 = vmatpush.bf16.xpose.msra.mxu0 0
    %1400 = vmatpush.bf16.xpose.msra.mxu0 0
    %1401 = vmatpush.bf16.xpose.msra.mxu0 0
    %1402 = vmatpush.bf16.xpose.msra.mxu0 %v1393
    %1403 = vmatmul.bf16.gmra.mxu0 %v1390
    %v1404 = vpop.f32.mrf.mxu0
    %v1405 = vadd.f32 0.0, %v1404
    %v1406 = vpop.f32.mrf.mxu0
    %1407 = vdwg.mxu0
    %1408 = vrot.lane.b32.xlu0 %v1175, 96
    %v1409 = vpop.permute.xlu0 %1408
    %1410 = vrot.lane.b32.xlu0 %v1175, 32
    %v1411 = vpop.permute.xlu0 %1410
    %v1413 = vsel %vm228, %v1409, 0
    %v1416 = vsel %vm228, %v1411, 0
    %1418 = vmatpush.bf16.xpose.msra.mxu0 0
    %1419 = vmatpush.bf16.xpose.msra.mxu0 0
    %1420 = vmatpush.bf16.xpose.msra.mxu0 0
    %1421 = vmatpush.bf16.xpose.msra.mxu0 0
    %1422 = vmatpush.bf16.xpose.msra.mxu0 0
    %1423 = vmatpush.bf16.xpose.msra.mxu0 0
    %1424 = vmatpush.bf16.xpose.msra.mxu0 0
    %1425 = vmatpush.bf16.xpose.msra.mxu0 %v1416
    %1426 = vmatmul.bf16.gmra.mxu0 %v1413
    %v1427 = vpop.f32.mrf.mxu0
    %v1428 = vadd.f32 0.0, %v1427
    %v1429 = vpop.f32.mrf.mxu0
    %1430 = vdwg.mxu0
    %v1431 = vmul.f32 %v1405, 0.25
    %v1432 = vmul.f32 %v1428, 0.25
    %v1433 = vadd.f32 %v1431, %v276
    %v1434 = vadd.f32 %v1432, %v277
    %v1435 = vsel %vm282, %v1433, -inf
    %1436 = vmax.xlane.f32.xlu0 %v1435
    %v1437 = vpop.xlane.xlu0 %1436
    %v1438 = vsel %vm282, %v1434, -inf
    %1439 = vmax.xlane.f32.xlu0 %v1438
    %v1440 = vpop.xlane.xlu0 %1439
    %v1441 = vsub.f32 %v1433, %v1437
    %v1442 = vsub.f32 %v1434, %v1440
    %v1443 = vmul.f32 %v1441, 1.442695
    %v1444 = vpow.pop %v1443
    %v1445 = vmul.f32 %v1442, 1.442695
    %v1446 = vpow.pop %v1445
    %v1447 = vsel %vm282, %v1444, 0.0
    %1448 = vadd.xlane.f32.xlu0 %v1447
    %v1449 = vpop.xlane.xlu0 %1448
    %v1450 = vsel %vm282, %v1446, 0.0
    %1451 = vadd.xlane.f32.xlu0 %v1450
    %v1452 = vpop.xlane.xlu0 %1451
    %v1453 = vrcp.pop %v1449
    %v1454 = vrcp.pop %v1452
    %v1455 = vmul.f32 %v1444, %v1453
    %v1456 = vmul.f32 %v1446, %v1454
    %v1457 = vpack.c.bf16 %v1455, %v1455
    %v1458 = vpack.c.bf16 %v1456, %v1456
    %1459 = vrot.lane.b32.xlu0 %v1339, 96
    %v1460 = vpop.permute.xlu0 %1459
    %v1462 = vsel %vm282, %v1457, 0
    %v1465 = vsel %vm310, %v1460, 0
    %1467 = vmatpush.bf16.msra.mxu0 0
    %1468 = vmatpush.bf16.msra.mxu0 0
    %1469 = vmatpush.bf16.msra.mxu0 0
    %1470 = vmatpush.bf16.msra.mxu0 0
    %1471 = vmatpush.bf16.msra.mxu0 0
    %1472 = vmatpush.bf16.msra.mxu0 0
    %1473 = vmatpush.bf16.msra.mxu0 0
    %1474 = vmatpush.bf16.msra.mxu0 %v1465
    %1475 = vmatmul.bf16.gmra.mxu0 %v1462
    %v1476 = vpop.f32.mrf.mxu0
    %v1477 = vadd.f32 0.0, %v1476
    %v1478 = vpop.f32.mrf.mxu0
    %1479 = vdwg.mxu0
    %1480 = vrot.lane.b32.xlu0 %v1363, 96
    %v1481 = vpop.permute.xlu0 %1480
    %v1483 = vsel %vm282, %v1458, 0
    %v1486 = vsel %vm310, %v1481, 0
    %1488 = vmatpush.bf16.msra.mxu0 0
    %1489 = vmatpush.bf16.msra.mxu0 0
    %1490 = vmatpush.bf16.msra.mxu0 0
    %1491 = vmatpush.bf16.msra.mxu0 0
    %1492 = vmatpush.bf16.msra.mxu0 0
    %1493 = vmatpush.bf16.msra.mxu0 0
    %1494 = vmatpush.bf16.msra.mxu0 0
    %1495 = vmatpush.bf16.msra.mxu0 %v1486
    %1496 = vmatmul.bf16.gmra.mxu0 %v1483
    %v1497 = vpop.f32.mrf.mxu0
    %v1498 = vadd.f32 0.0, %v1497
    %v1499 = vpop.f32.mrf.mxu0
    %1500 = vdwg.mxu0
    %1501 = vrot.lane.b32.xlu0 %v1151, 80
    %v1502 = vpop.permute.xlu0 %1501
    %1503 = vrot.lane.b32.xlu0 %v1151, 16
    %v1504 = vpop.permute.xlu0 %1503
    %v1506 = vsel %vm228, %v1502, 0
    %v1509 = vsel %vm228, %v1504, 0
    %1511 = vmatpush.bf16.xpose.msra.mxu0 0
    %1512 = vmatpush.bf16.xpose.msra.mxu0 0
    %1513 = vmatpush.bf16.xpose.msra.mxu0 0
    %1514 = vmatpush.bf16.xpose.msra.mxu0 0
    %1515 = vmatpush.bf16.xpose.msra.mxu0 0
    %1516 = vmatpush.bf16.xpose.msra.mxu0 0
    %1517 = vmatpush.bf16.xpose.msra.mxu0 0
    %1518 = vmatpush.bf16.xpose.msra.mxu0 %v1509
    %1519 = vmatmul.bf16.gmra.mxu0 %v1506
    %v1520 = vpop.f32.mrf.mxu0
    %v1521 = vadd.f32 0.0, %v1520
    %v1522 = vpop.f32.mrf.mxu0
    %1523 = vdwg.mxu0
    %1524 = vrot.lane.b32.xlu0 %v1175, 80
    %v1525 = vpop.permute.xlu0 %1524
    %1526 = vrot.lane.b32.xlu0 %v1175, 16
    %v1527 = vpop.permute.xlu0 %1526
    %v1529 = vsel %vm228, %v1525, 0
    %v1532 = vsel %vm228, %v1527, 0
    %1534 = vmatpush.bf16.xpose.msra.mxu0 0
    %1535 = vmatpush.bf16.xpose.msra.mxu0 0
    %1536 = vmatpush.bf16.xpose.msra.mxu0 0
    %1537 = vmatpush.bf16.xpose.msra.mxu0 0
    %1538 = vmatpush.bf16.xpose.msra.mxu0 0
    %1539 = vmatpush.bf16.xpose.msra.mxu0 0
    %1540 = vmatpush.bf16.xpose.msra.mxu0 0
    %1541 = vmatpush.bf16.xpose.msra.mxu0 %v1532
    %1542 = vmatmul.bf16.gmra.mxu0 %v1529
    %v1543 = vpop.f32.mrf.mxu0
    %v1544 = vadd.f32 0.0, %v1543
    %v1545 = vpop.f32.mrf.mxu0
    %1546 = vdwg.mxu0
    %v1547 = vmul.f32 %v1521, 0.25
    %v1548 = vmul.f32 %v1544, 0.25
    %v1549 = vadd.f32 %v1547, %v276
    %v1550 = vadd.f32 %v1548, %v277
    %v1551 = vsel %vm282, %v1549, -inf
    %1552 = vmax.xlane.f32.xlu0 %v1551
    %v1553 = vpop.xlane.xlu0 %1552
    %v1554 = vsel %vm282, %v1550, -inf
    %1555 = vmax.xlane.f32.xlu0 %v1554
    %v1556 = vpop.xlane.xlu0 %1555
    %v1557 = vsub.f32 %v1549, %v1553
    %v1558 = vsub.f32 %v1550, %v1556
    %v1559 = vmul.f32 %v1557, 1.442695
    %v1560 = vpow.pop %v1559
    %v1561 = vmul.f32 %v1558, 1.442695
    %v1562 = vpow.pop %v1561
    %v1563 = vsel %vm282, %v1560, 0.0
    %1564 = vadd.xlane.f32.xlu0 %v1563
    %v1565 = vpop.xlane.xlu0 %1564
    %v1566 = vsel %vm282, %v1562, 0.0
    %1567 = vadd.xlane.f32.xlu0 %v1566
    %v1568 = vpop.xlane.xlu0 %1567
    %v1569 = vrcp.pop %v1565
    %v1570 = vrcp.pop %v1568
    %v1571 = vmul.f32 %v1560, %v1569
    %v1572 = vmul.f32 %v1562, %v1570
    %v1573 = vpack.c.bf16 %v1571, %v1571
    %v1574 = vpack.c.bf16 %v1572, %v1572
    %1575 = vrot.lane.b32.xlu0 %v1339, 80
    %v1576 = vpop.permute.xlu0 %1575
    %v1578 = vsel %vm282, %v1573, 0
    %v1581 = vsel %vm310, %v1576, 0
    %1583 = vmatpush.bf16.msra.mxu0 0
    %1584 = vmatpush.bf16.msra.mxu0 0
    %1585 = vmatpush.bf16.msra.mxu0 0
    %1586 = vmatpush.bf16.msra.mxu0 0
    %1587 = vmatpush.bf16.msra.mxu0 0
    %1588 = vmatpush.bf16.msra.mxu0 0
    %1589 = vmatpush.bf16.msra.mxu0 0
    %1590 = vmatpush.bf16.msra.mxu0 %v1581
    %1591 = vmatmul.bf16.gmra.mxu0 %v1578
    %v1592 = vpop.f32.mrf.mxu0
    %v1593 = vadd.f32 0.0, %v1592
    %v1594 = vpop.f32.mrf.mxu0
    %1595 = vdwg.mxu0
    %1596 = vrot.lane.b32.xlu0 %v1363, 80
    %v1597 = vpop.permute.xlu0 %1596
    %v1599 = vsel %vm282, %v1574, 0
    %v1602 = vsel %vm310, %v1597, 0
    %1604 = vmatpush.bf16.msra.mxu0 0
    %1605 = vmatpush.bf16.msra.mxu0 0
    %1606 = vmatpush.bf16.msra.mxu0 0
    %1607 = vmatpush.bf16.msra.mxu0 0
    %1608 = vmatpush.bf16.msra.mxu0 0
    %1609 = vmatpush.bf16.msra.mxu0 0
    %1610 = vmatpush.bf16.msra.mxu0 0
    %1611 = vmatpush.bf16.msra.mxu0 %v1602
    %1612 = vmatmul.bf16.gmra.mxu0 %v1599
    %v1613 = vpop.f32.mrf.mxu0
    %v1614 = vadd.f32 0.0, %v1613
    %v1615 = vpop.f32.mrf.mxu0
    %1616 = vdwg.mxu0
    %1619 = vrot.lane.b32.xlu0 %v1358, 16
    %v1620 = vpop.permute.xlu0 %1619
    %1621 = vrot.lane.b32.xlu0 %v1382, 16
    %v1622 = vpop.permute.xlu0 %1621
    %1627 = vrot.lane.b32.xlu0 %v1477, 32
    %v1628 = vpop.permute.xlu0 %1627
    %1629 = vrot.lane.b32.xlu0 %v1498, 32
    %v1630 = vpop.permute.xlu0 %1629
    %1635 = vrot.lane.b32.xlu0 %v1593, 48
    %v1636 = vpop.permute.xlu0 %1635
    %1637 = vrot.lane.b32.xlu0 %v1614, 48
    %v1638 = vpop.permute.xlu0 %1637
    %v1641 = vsel %vm228, %v1241, %v1620
    %v1642 = vsel %vm228, %v1260, %v1622
    %v1643 = vsel %vm726, %v1641, %v1628
    %v1644 = vsel %vm726, %v1642, %v1630
    %v1645 = vsel %vm729, %v1643, %v1636
    %v1646 = vsel %vm729, %v1644, %v1638
    %v1647 = vpack.c.bf16 %v1646, %v1645
    %s1648 = scalar_lea.vmem %s6, 32
    %v1649 = vld [vmem:[%s1648] sm:$0xf]
    %v1650 = vld [vmem:[%s1648 + $0x4] sm:$0xf]
    %v1651 = vld [vmem:[%s1648 + $0x8] sm:$0xf]
    %v1652 = vld [vmem:[%s1648 + $0xc] sm:$0xf]
    %v1653 = vld [vmem:[%s1648 + $0x10] sm:$0xf]
    %v1654 = vld [vmem:[%s1648 + $0x14] sm:$0xf]
    %v1655 = vld [vmem:[%s1648 + $0x18] sm:$0xf]
    %v1656 = vld [vmem:[%s1648 + $0x1c] sm:$0xf]
    %s1657 = scalar_lea.vmem %s7, 1
    %v1658 = vld [vmem:[%s1657] sm:$0x1]
    %v1660 = vperm.slane %v1658, 0
    %v1670 = vunpack.c.l.b16 %v1649
    %v1671 = vunpack.c.l.b16 %v1650
    %v1672 = vunpack.c.l.b16 %v1651
    %v1673 = vunpack.c.l.b16 %v1652
    %v1674 = vunpack.c.l.b16 %v1653
    %v1675 = vunpack.c.l.b16 %v1654
    %v1676 = vunpack.c.l.b16 %v1655
    %v1677 = vunpack.c.l.b16 %v1656
    %v1678 = vpack.c.b16 %v1671, %v1670
    %v1679 = vpack.c.b16 %v1673, %v1672
    %v1680 = vpack.c.b16 %v1675, %v1674
    %v1681 = vpack.c.b16 %v1677, %v1676
    %v1687 = vsel %vm71, %v1647, 0
    %1689 = vmatpush.bf16.msra.mxu0 0
    %1690 = vmatpush.bf16.msra.mxu0 0
    %1691 = vmatpush.bf16.msra.mxu0 0
    %1692 = vmatpush.bf16.msra.mxu0 0
    %1693 = vmatpush.bf16.msra.mxu0 %v1681
    %1694 = vmatpush.bf16.msra.mxu0 %v1680
    %1695 = vmatpush.bf16.msra.mxu0 %v1679
    %1696 = vmatpush.bf16.msra.mxu0 %v1678
    %1697 = vmatmul.bf16.gmra.mxu0 %v1687
    %v1698 = vpop.f32.mrf.mxu0
    %v1699 = vadd.f32 %v1660, %v1698
    %v1700 = vpop.f32.mrf.mxu0
    %v1701 = vadd.f32 %v1660, %v1700
    %1702 = vdwg.mxu0
    %v1703 = vadd.f32 %v1055, %v1699
    %v1704 = vadd.f32 %v1056, %v1701
    %s1705 = scalar_lea.vmem %s8, 1
    %v1706 = vld [vmem:[%s1705] sm:$0x1]
    %s1707 = scalar_lea.vmem %s9, 1
    %v1708 = vld [vmem:[%s1707] sm:$0x1]
    %v1709 = vsel %vm71, %v1703, 0.0
    %1710 = vadd.xlane.f32.xlu0 %v1709
    %v1711 = vpop.xlane.xlu0 %1710
    %v1712 = vsel %vm71, %v1704, 0.0
    %1713 = vadd.xlane.f32.xlu0 %v1712
    %v1714 = vpop.xlane.xlu0 %1713
    %v1715 = vmul.f32 %v1711, %v84
    %v1716 = vmul.f32 %v1714, %v84
    %v1717 = vsub.f32 %v1703, %v1715
    %v1718 = vsub.f32 %v1704, %v1716
    %v1719 = vmul.f32 %v1717, %v1717
    %v1720 = vmul.f32 %v1718, %v1718
    %v1721 = vsel %vm71, %v1719, 0.0
    %1722 = vadd.xlane.f32.xlu0 %v1721
    %v1723 = vpop.xlane.xlu0 %1722
    %v1724 = vsel %vm71, %v1720, 0.0
    %1725 = vadd.xlane.f32.xlu0 %v1724
    %v1726 = vpop.xlane.xlu0 %1725
    %v1727 = vmul.f32 %v1723, %v84
    %v1728 = vmul.f32 %v1726, %v84
    %v1729 = vadd.f32 %v1727, 1e-05
    %v1730 = vadd.f32 %v1728, 1e-05
    %v1731 = vrsqrt.pop %v1729
    %v1732 = vmul.f32 %v1731, %v1729
    %v1733 = vmul.f32 %v1732, %v1731
    %v1734 = vmul.f32 0.5, %v1733
    %v1735 = vsub.f32 1.5, %v1734
    %v1736 = vmul.f32 %v1731, %v1735
    %vm1737 = vweird.f32 %v1729
    %vm1738 = vweird.f32 %v1731
    %vm1739 = vmor %vm1737, %vm1738
    %v1740 = vsel %vm1739, %v1731, %v1736
    %v1741 = vrsqrt.pop %v1730
    %v1742 = vmul.f32 %v1741, %v1730
    %v1743 = vmul.f32 %v1742, %v1741
    %v1744 = vmul.f32 0.5, %v1743
    %v1745 = vsub.f32 1.5, %v1744
    %v1746 = vmul.f32 %v1741, %v1745
    %vm1747 = vweird.f32 %v1730
    %vm1748 = vweird.f32 %v1741
    %vm1749 = vmor %vm1747, %vm1748
    %v1750 = vsel %vm1749, %v1741, %v1746
    %v1751 = vmul.f32 %v1717, %v1740
    %v1752 = vmul.f32 %v1718, %v1750
    %v1754 = vperm.slane %v1706, 0
    %v1756 = vmul.f32 %v1751, %v1754
    %v1757 = vmul.f32 %v1752, %v1754
    %v1759 = vperm.slane %v1708, 0
    %v1761 = vadd.f32 %v1756, %v1759
    %v1762 = vadd.f32 %v1757, %v1759
    %v1763 = vpack.c.bf16 %v1762, %v1761
    %s1764 = scalar_lea.vmem %s10, 32
    %v1765 = vld [vmem:[%s1764] sm:$0xf]
    %v1766 = vld [vmem:[%s1764 + $0x4] sm:$0xf]
    %v1767 = vld [vmem:[%s1764 + $0x8] sm:$0xf]
    %v1768 = vld [vmem:[%s1764 + $0xc] sm:$0xf]
    %v1769 = vld [vmem:[%s1764 + $0x10] sm:$0xf]
    %v1770 = vld [vmem:[%s1764 + $0x14] sm:$0xf]
    %v1771 = vld [vmem:[%s1764 + $0x18] sm:$0xf]
    %v1772 = vld [vmem:[%s1764 + $0x1c] sm:$0xf]
    %s1773 = scalar_lea.vmem %s11, 1
    %v1774 = vld [vmem:[%s1773] sm:$0x1]
    %v1776 = vperm.slane %v1774, 0
    %v1786 = vunpack.c.l.b16 %v1765
    %v1787 = vunpack.c.l.b16 %v1766
    %v1788 = vunpack.c.l.b16 %v1767
    %v1789 = vunpack.c.l.b16 %v1768
    %v1790 = vunpack.c.l.b16 %v1769
    %v1791 = vunpack.c.l.b16 %v1770
    %v1792 = vunpack.c.l.b16 %v1771
    %v1793 = vunpack.c.l.b16 %v1772
    %v1794 = vpack.c.b16 %v1787, %v1786
    %v1795 = vpack.c.b16 %v1789, %v1788
    %v1796 = vpack.c.b16 %v1791, %v1790
    %v1797 = vpack.c.b16 %v1793, %v1792
    %v1803 = vsel %vm71, %v1763, 0
    %1805 = vmatpush.bf16.msra.mxu0 0
    %1806 = vmatpush.bf16.msra.mxu0 0
    %1807 = vmatpush.bf16.msra.mxu0 0
    %1808 = vmatpush.bf16.msra.mxu0 0
    %1809 = vmatpush.bf16.msra.mxu0 %v1797
    %1810 = vmatpush.bf16.msra.mxu0 %v1796
    %1811 = vmatpush.bf16.msra.mxu0 %v1795
    %1812 = vmatpush.bf16.msra.mxu0 %v1794
    %1813 = vmatmul.bf16.gmra.mxu0 %v1803
    %v1814 = vpop.f32.mrf.mxu0
    %v1815 = vadd.f32 %v1776, %v1814
    %v1816 = vpop.f32.mrf.mxu0
    %v1817 = vadd.f32 %v1776, %v1816
    %1818 = vdwg.mxu0
    %v1819 = vmul.f32 %v1815, %v1815
    %v1820 = vmul.f32 %v1817, %v1817
    %v1821 = vmul.f32 %v1815, %v1819
    %v1822 = vmul.f32 %v1817, %v1820
    %v1823 = vmul.f32 %v1821, 0.044715
    %v1824 = vmul.f32 %v1822, 0.044715
    %v1825 = vadd.f32 %v1815, %v1823
    %v1826 = vadd.f32 %v1817, %v1824
    %v1827 = vmul.f32 %v1825, 0.7978846
    %v1828 = vmul.f32 %v1826, 0.7978846
    %v1829 = vtanh.pop %v1827
    %v1830 = vtanh.pop %v1828
    %v1831 = vadd.f32 %v1829, 1.0
    %v1832 = vadd.f32 %v1830, 1.0
    %v1833 = vmul.f32 %v1831, 0.5
    %v1834 = vmul.f32 %v1832, 0.5
    %v1835 = vmul.f32 %v1815, %v1833
    %v1836 = vmul.f32 %v1817, %v1834
    %v1837 = vpack.c.bf16 %v1836, %v1835
    %s1838 = scalar_lea.vmem %s12, 64
    %v1839 = vld [vmem:[%s1838] sm:$0xf]
    %v1840 = vld [vmem:[%s1838 + $0x4] sm:$0xf]
    %v1841 = vld [vmem:[%s1838 + $0x8] sm:$0xf]
    %v1842 = vld [vmem:[%s1838 + $0xc] sm:$0xf]
    %v1843 = vld [vmem:[%s1838 + $0x10] sm:$0xf]
    %v1844 = vld [vmem:[%s1838 + $0x14] sm:$0xf]
    %v1845 = vld [vmem:[%s1838 + $0x18] sm:$0xf]
    %v1846 = vld [vmem:[%s1838 + $0x1c] sm:$0xf]
    %v1847 = vld [vmem:[%s1838 + $0x20] sm:$0xf]
    %v1848 = vld [vmem:[%s1838 + $0x24] sm:$0xf]
    %v1849 = vld [vmem:[%s1838 + $0x28] sm:$0xf]
    %v1850 = vld [vmem:[%s1838 + $0x2c] sm:$0xf]
    %v1851 = vld [vmem:[%s1838 + $0x30] sm:$0xf]
    %v1852 = vld [vmem:[%s1838 + $0x34] sm:$0xf]
    %v1853 = vld [vmem:[%s1838 + $0x38] sm:$0xf]
    %v1854 = vld [vmem:[%s1838 + $0x3c] sm:$0xf]
    %s1855 = scalar_lea.vmem %s13, 1
    %v1856 = vld [vmem:[%s1855] sm:$0x1]
    %v1858 = vperm.slane %v1856, 0
    %v1876 = vunpack.c.l.b16 %v1839
    %v1877 = vunpack.c.l.b16 %v1840
    %v1878 = vunpack.c.l.b16 %v1841
    %v1879 = vunpack.c.l.b16 %v1842
    %v1880 = vunpack.c.l.b16 %v1843
    %v1881 = vunpack.c.l.b16 %v1844
    %v1882 = vunpack.c.l.b16 %v1845
    %v1883 = vunpack.c.l.b16 %v1846
    %v1884 = vunpack.c.l.b16 %v1847
    %v1885 = vunpack.c.l.b16 %v1848
    %v1886 = vunpack.c.l.b16 %v1849
    %v1887 = vunpack.c.l.b16 %v1850
    %v1888 = vunpack.c.l.b16 %v1851
    %v1889 = vunpack.c.l.b16 %v1852
    %v1890 = vunpack.c.l.b16 %v1853
    %v1891 = vunpack.c.l.b16 %v1854
    %v1892 = vpack.c.b16 %v1877, %v1876
    %v1893 = vpack.c.b16 %v1879, %v1878
    %v1894 = vpack.c.b16 %v1881, %v1880
    %v1895 = vpack.c.b16 %v1883, %v1882
    %v1896 = vpack.c.b16 %v1885, %v1884
    %v1897 = vpack.c.b16 %v1887, %v1886
    %v1898 = vpack.c.b16 %v1889, %v1888
    %v1899 = vpack.c.b16 %v1891, %v1890
    %1908 = vmatpush.bf16.msra.mxu0 %v1899
    %1909 = vmatpush.bf16.msra.mxu0 %v1898
    %1910 = vmatpush.bf16.msra.mxu0 %v1897
    %1911 = vmatpush.bf16.msra.mxu0 %v1896
    %1912 = vmatpush.bf16.msra.mxu0 %v1895
    %1913 = vmatpush.bf16.msra.mxu0 %v1894
    %1914 = vmatpush.bf16.msra.mxu0 %v1893
    %1915 = vmatpush.bf16.msra.mxu0 %v1892
    %1916 = vmatmul.bf16.gmra.mxu0 %v1837
    %v1917 = vpop.f32.mrf.mxu0
    %v1918 = vadd.f32 %v1858, %v1917
    %v1919 = vpop.f32.mrf.mxu0
    %v1920 = vadd.f32 %v1858, %v1919
    %1921 = vdwg.mxu0
    %v1922 = vadd.f32 %v1761, %v1918
    %v1923 = vadd.f32 %v1762, %v1920
    %s1924 = scalar_lea.vmem %s14, 1
    %v1925 = vld [vmem:[%s1924] sm:$0x1]
    %s1926 = scalar_lea.vmem %s15, 1
    %v1927 = vld [vmem:[%s1926] sm:$0x1]
    %v1928 = vsel %vm71, %v1922, 0.0
    %1929 = vadd.xlane.f32.xlu0 %v1928
    %v1930 = vpop.xlane.xlu0 %1929
    %v1931 = vsel %vm71, %v1923, 0.0
    %1932 = vadd.xlane.f32.xlu0 %v1931
    %v1933 = vpop.xlane.xlu0 %1932
    %v1934 = vmul.f32 %v1930, %v84
    %v1935 = vmul.f32 %v1933, %v84
    %v1936 = vsub.f32 %v1922, %v1934
    %v1937 = vsub.f32 %v1923, %v1935
    %v1938 = vmul.f32 %v1936, %v1936
    %v1939 = vmul.f32 %v1937, %v1937
    %v1940 = vsel %vm71, %v1938, 0.0
    %1941 = vadd.xlane.f32.xlu0 %v1940
    %v1942 = vpop.xlane.xlu0 %1941
    %v1943 = vsel %vm71, %v1939, 0.0
    %1944 = vadd.xlane.f32.xlu0 %v1943
    %v1945 = vpop.xlane.xlu0 %1944
    %v1946 = vmul.f32 %v1942, %v84
    %v1947 = vmul.f32 %v1945, %v84
    %v1948 = vadd.f32 %v1946, 1e-05
    %v1949 = vadd.f32 %v1947, 1e-05
    %v1950 = vrsqrt.pop %v1948
    %v1951 = vmul.f32 %v1950, %v1948
    %v1952 = vmul.f32 %v1951, %v1950
    %v1953 = vmul.f32 0.5, %v1952
    %v1954 = vsub.f32 1.5, %v1953
    %v1955 = vmul.f32 %v1950, %v1954
    %vm1956 = vweird.f32 %v1948
    %vm1957 = vweird.f32 %v1950
    %vm1958 = vmor %vm1956, %vm1957
    %v1959 = vsel %vm1958, %v1950, %v1955
    %v1960 = vrsqrt.pop %v1949
    %v1961 = vmul.f32 %v1960, %v1949
    %v1962 = vmul.f32 %v1961, %v1960
    %v1963 = vmul.f32 0.5, %v1962
    %v1964 = vsub.f32 1.5, %v1963
    %v1965 = vmul.f32 %v1960, %v1964
    %vm1966 = vweird.f32 %v1949
    %vm1967 = vweird.f32 %v1960
    %vm1968 = vmor %vm1966, %vm1967
    %v1969 = vsel %vm1968, %v1960, %v1965
    %v1970 = vmul.f32 %v1936, %v1959
    %v1971 = vmul.f32 %v1937, %v1969
    %v1973 = vperm.slane %v1925, 0
    %v1975 = vmul.f32 %v1970, %v1973
    %v1976 = vmul.f32 %v1971, %v1973
    %v1978 = vperm.slane %v1927, 0
    %v1980 = vadd.f32 %v1975, %v1978
    %v1981 = vadd.f32 %v1976, %v1978
    %v1983 = vsel %vm282, %v61, 0
    %1985 = vmatpush.msra.mxu0 0.0
    %1986 = vmatpush.msra.mxu0 0.0
    %1987 = vmatpush.msra.mxu0 0.0
    %1988 = vmatpush.msra.mxu0 0.0
    %1989 = vmatpush.msra.mxu0 0.0
    %1990 = vmatpush.msra.mxu0 0.0
    %1991 = vmatpush.msra.mxu0 0.0
    %1992 = vmatpush.msra.mxu0 0.0
    %1993 = vmatpush.msra.mxu0 0.0
    %1994 = vmatpush.msra.mxu0 0.0
    %1995 = vmatpush.msra.mxu0 0.0
    %1996 = vmatpush.msra.mxu0 0.0
    %1997 = vmatpush.msra.mxu0 0.0
    %1998 = vmatpush.msra.mxu0 0.0
    %1999 = vmatpush.msra.mxu0 0.0
    %2000 = vmatpush.msra.mxu0 %v1980
    %2001 = vmatmul.f32.gmra.mxu0 %v1983
    %v2002 = vpop.f32.mrf.mxu0
    %v2003 = vadd.f32 0.0, %v2002
    %2004 = vdwg.mxu0
    %v2006 = vsel %vm282, %v62, 0
    %2008 = vmatpush.msra.mxu0 0.0
    %2009 = vmatpush.msra.mxu0 0.0
    %2010 = vmatpush.msra.mxu0 0.0
    %2011 = vmatpush.msra.mxu0 0.0
    %2012 = vmatpush.msra.mxu0 0.0
    %2013 = vmatpush.msra.mxu0 0.0
    %2014 = vmatpush.msra.mxu0 0.0
    %2015 = vmatpush.msra.mxu0 0.0
    %2016 = vmatpush.msra.mxu0 0.0
    %2017 = vmatpush.msra.mxu0 0.0
    %2018 = vmatpush.msra.mxu0 0.0
    %2019 = vmatpush.msra.mxu0 0.0
    %2020 = vmatpush.msra.mxu0 0.0
    %2021 = vmatpush.msra.mxu0 0.0
    %2022 = vmatpush.msra.mxu0 0.0
    %2023 = vmatpush.msra.mxu0 %v1981
    %2024 = vmatmul.f32.gmra.mxu0 %v2006
    %v2025 = vpop.f32.mrf.mxu0
    %v2026 = vadd.f32 0.0, %v2025
    %2027 = vdwg.mxu0
    %vm2028 = vcmask 57344
    %v2029 = vsel %vm2028, %v61, 0.0
    %2030 = vadd.xlane.f32.xlu0 %v2029
    %v2031 = vpop.xlane.xlu0 %2030
    %v2032 = vsel %vm2028, %v62, 0.0
    %2033 = vadd.xlane.f32.xlu0 %v2032
    %v2034 = vpop.xlane.xlu0 %2033
    %v2035 = vmax.f32 %v2031, 1e-09
    %v2036 = vmax.f32 %v2034, 1e-09
    %v2037 = vrcp.pop %v2035
    %v2038 = vmul.f32 %v2035, %v2037
    %v2039 = vsub.f32 1.0, %v2038
    %v2040 = vmul.f32 %v2037, %v2039
    %v2041 = vadd.f32 %v2037, %v2040
    %vm2042 = vweird.f32 %v2035
    %vm2043 = vweird.f32 %v2037
    %vm2044 = vmor %vm2042, %vm2043
    %v2045 = vsel %vm2044, %v2037, %v2041
    %v2046 = vand.u32 2147483647, %v2035
    %vm2047 = vcmp.eq.f32.partialorder %v2046, 8.507059e+37
    %v2048 = vand.u32 %v2035, 2147483648
    %v2049 = vor.u32 1.1754944e-38, %v2048
    %v2050 = vsel %vm2047, %v2049, %v2045
    %v2051 = vmul.f32 %v2003, %v2050
    %v2052 = vrcp.pop %v2036
    %v2053 = vmul.f32 %v2036, %v2052
    %v2054 = vsub.f32 1.0, %v2053
    %v2055 = vmul.f32 %v2052, %v2054
    %v2056 = vadd.f32 %v2052, %v2055
    %vm2057 = vweird.f32 %v2036
    %vm2058 = vweird.f32 %v2052
    %vm2059 = vmor %vm2057, %vm2058
    %v2060 = vsel %vm2059, %v2052, %v2056
    %v2061 = vand.u32 2147483647, %v2036
    %vm2062 = vcmp.eq.f32.partialorder %v2061, 8.507059e+37
    %v2063 = vand.u32 %v2036, 2147483648
    %v2064 = vor.u32 1.1754944e-38, %v2063
    %v2065 = vsel %vm2062, %v2064, %v2060
    %v2066 = vmul.f32 %v2026, %v2065
    %v2067 = vld [vmem:[%s16] sm:$0xff]
    %v2068 = vld [vmem:[%s16 + $0x8] sm:$0xff]
    %v2069 = vld [vmem:[%s16 + $0x10] sm:$0xff]
    %v2070 = vld [vmem:[%s16 + $0x18] sm:$0xff]
    %v2071 = vld [vmem:[%s16 + $0x20] sm:$0xff]
    %v2072 = vld [vmem:[%s16 + $0x28] sm:$0xff]
    %v2073 = vld [vmem:[%s16 + $0x30] sm:$0xff]
    %v2074 = vld [vmem:[%s16 + $0x38] sm:$0xff]
    %v2075 = vld [vmem:[%s17] sm:$0x1]
    %v2077 = vperm.slane %v2075, 0
    %v2081 = vrot.slane %v2066, 7
    %vm2082 = vcmask 1041409
    %v2083 = vsel %vm2082, %v2081, %v2051
    %v2084 = vsel %vm71, %v2083, 0
    %2086 = vmatpush.msra.mxu0 0.0
    %2087 = vmatpush.msra.mxu0 0.0
    %2088 = vmatpush.msra.mxu0 0.0
    %2089 = vmatpush.msra.mxu0 0.0
    %2090 = vmatpush.msra.mxu0 0.0
    %2091 = vmatpush.msra.mxu0 0.0
    %2092 = vmatpush.msra.mxu0 0.0
    %2093 = vmatpush.msra.mxu0 0.0
    %2094 = vmatpush.msra.mxu0 %v2074
    %2095 = vmatpush.msra.mxu0 %v2073
    %2096 = vmatpush.msra.mxu0 %v2072
    %2097 = vmatpush.msra.mxu0 %v2071
    %2098 = vmatpush.msra.mxu0 %v2070
    %2099 = vmatpush.msra.mxu0 %v2069
    %2100 = vmatpush.msra.mxu0 %v2068
    %2101 = vmatpush.msra.mxu0 %v2067
    %2102 = vmatmul.f32.gmra.mxu0 %v2084
    %v2103 = vpop.f32.mrf.mxu0
    %v2104 = vadd.f32 %v2077, %v2103
    %2105 = vdwg.mxu0
    %2106 = vst [vmem:[#allocation2] sm:$0x3] %v2104
    // Predicated region
    $region74: #{deberta_forward.1} parent=1 // pred_check
      _
    $region75: #{deberta_forward.1} parent=1 // pred_check_branch
      %2108 = sbr.rel (0) target = $region77
    $region76: #{deberta_forward.1} parent=1 // pred_region
      %2110 = vsyncadd [#allocation3], 0
      %s2112 = sshll.u32 [#allocation2], 4
      %s2113 = int_to_ptr.vmem [resolvable:$true] %s2112
      %s2114 = sshll.u32 %s18, 4
      %s2115 = int_to_ptr.hbm [resolvable:$true] %s2114
      %2117 = dma.vmem_to_hbm [thread:$0]  %s2113, 32, %s2115, [#allocation3]
    $region77: #{deberta_forward.1} parent=1 // pred_fallthru
      _
    // Predicated region
    $region78: #{deberta_forward.1} parent=1 // pred_check
      _
    $region79: #{deberta_forward.1} parent=1 // pred_check_branch
      %2119 = sbr.rel (0) target = $region81
    $region80: #{deberta_forward.1} parent=1 // pred_region
      %2121 = dma.done [#allocation3], 32
    $region81: #{deberta_forward.1} parent=1 // pred_fallthru
      _
    %2122 = vsyncpa [#allocation3], 1

</llo_original>
